<compile_context>
chip_gen: v5e
topology: v5e:2x2
jax: 0.10.0
libtpu: 0.0.40
codegen_flags: <defaults>
</compile_context>

<pallas_src>
import math

import jax
import jax.numpy as jnp
import numpy as np
from jax import lax
from jax.experimental import pallas as pl
from jax.experimental.pallas import tpu as pltpu

# ---- model hyper-parameters (small, consistent with the module) -------------
HIDDEN = 32
NUM_HEADS = 4
HEAD_DIM = HIDDEN // NUM_HEADS
FF_HIDDEN = 64
NUM_LAYERS = 2
SEQ = 8
BATCH = 2
EPS = 1e-6
SQRT_2_OVER_PI = math.sqrt(2.0 / math.pi)
NEG_INF = -1e9


# ------------------------------ Pallas kernel --------------------------------
def _encoder_kernel(x_ref, bias_ref, wqkv_ref, bqkv_ref, wo_ref,
                    w1_ref, bff1_ref, w2_ref, vecs_ref, out_ref):
    x = x_ref[...]               # (B*S, D) activations for the whole batch
    attn_bias = bias_ref[...]    # (B*S, B*S) additive bias: 0 allowed / -1e9 masked
    scale = 1.0 / math.sqrt(HEAD_DIM)

    def layernorm(inp, g, b):
        # torch.std uses the unbiased (N-1) estimator; module adds eps to std.
        mean = jnp.mean(inp, axis=-1, keepdims=True)
        var = jnp.sum((inp - mean) ** 2, axis=-1, keepdims=True) / (inp.shape[-1] - 1)
        inv = pl.reciprocal(jnp.sqrt(var) + EPS, approx=False)
        return g * (inp - mean) * inv + b

    for l in range(NUM_LAYERS):          # static unroll over layers
        wqkv = wqkv_ref[l]               # (D, 3D)
        bqkv = bqkv_ref[l]               # (1, 3D)
        wo = wo_ref[l]                   # (D, D)
        w1 = w1_ref[l]                   # (D, F)
        bff1 = bff1_ref[l]               # (1, F)
        w2 = w2_ref[l]                   # (F, D)
        vecs = vecs_ref[l]               # (6, D): bo, g1, beta1, bff2, g2, beta2
        bo, g1, beta1 = vecs[0:1, :], vecs[1:2, :], vecs[2:3, :]
        bff2, g2, beta2 = vecs[3:4, :], vecs[4:5, :], vecs[5:6, :]

        # --- fused QKV projection: one MXU matmul instead of three ---
        qkv = jnp.dot(x, wqkv, preferred_element_type=jnp.float32) + bqkv  # (B*S, 3D)

        # --- multi-head attention ---
        # Batch separation + key masking come from the block-diagonal additive
        # bias, so all B*S rows are processed with a single (B*S, B*S) softmax
        # per head.  Head outputs are accumulated via slices of Wo.
        attn_out = jnp.zeros(x.shape, jnp.float32)
        for h in range(NUM_HEADS):       # static unroll over heads
            lo = h * HEAD_DIM
            qh = qkv[:, lo:lo + HEAD_DIM]
            kh = qkv[:, HIDDEN + lo:HIDDEN + lo + HEAD_DIM]
            vh = qkv[:, 2 * HIDDEN + lo:2 * HIDDEN + lo + HEAD_DIM]
            scores = lax.dot_general(qh, kh, (((1,), (1,)), ((), ())),
                                     preferred_element_type=jnp.float32)
            scores = scores * scale + attn_bias
            scores = scores - jnp.max(scores, axis=-1, keepdims=True)
            e = jnp.exp(scores)
            p = e * pl.reciprocal(jnp.sum(e, axis=-1, keepdims=True), approx=False)
            oh = jnp.dot(p, vh, preferred_element_type=jnp.float32)        # (B*S, HD)
            attn_out = attn_out + jnp.dot(oh, wo[lo:lo + HEAD_DIM, :],
                                          preferred_element_type=jnp.float32)
        attn_out = attn_out + bo

        # TODO(synk): dropout (p=0.1) omitted — kernel implements eval/inference mode.
        x1 = layernorm(x + attn_out, g1, beta1)

        # --- feed-forward with tanh-approx GELU ---
        h1 = jnp.dot(x1, w1, preferred_element_type=jnp.float32) + bff1    # (B*S, F)
        cdf = 0.5 * (1.0 + jnp.tanh(SQRT_2_OVER_PI * (h1 + 0.044715 * h1 ** 3)))
        ff = jnp.dot(h1 * cdf, w2, preferred_element_type=jnp.float32) + bff2
        x = layernorm(x1 + ff, g2, beta2)

    out_ref[...] = x


# ------------------------------ wrapper ---------------------------------------
def encoder_pallas(x, mask, params):
    B, S, D = x.shape
    BS = B * S
    x2d = x.reshape(BS, D)

    # Additive attention bias (B*S, B*S): 0 where row may attend to column,
    # -1e9 for masked key positions and for cross-batch pairs (this folds the
    # batch dimension into a single attention matrix inside the kernel).
    key_ok = (mask.reshape(B, S) != 0.0)                              # (B, S)
    allowed = (jnp.eye(B, dtype=bool)[:, None, :, None]
               & key_ok[None, None, :, :])                            # (B, 1, B, S)
    allowed = jnp.broadcast_to(allowed, (B, S, B, S)).reshape(BS, BS)
    attn_bias = jnp.where(allowed, 0.0, NEG_INF).astype(jnp.float32)

    # Stack per-layer parameters along a leading layer axis; fuse QKV weights
    # and pack the small per-layer vectors into a single (6, D) block.
    wqkv = jnp.stack([jnp.concatenate([p["wq"], p["wk"], p["wv"]], 1) for p in params])
    bqkv = jnp.stack([jnp.concatenate([p["bq"], p["bk"], p["bv"]], 1) for p in params])
    wo = jnp.stack([p["wo"] for p in params])
    w1 = jnp.stack([p["w1"] for p in params])
    bff1 = jnp.stack([p["bff1"] for p in params])
    w2 = jnp.stack([p["w2"] for p in params])
    vecs = jnp.stack([jnp.concatenate([p["bo"], p["g1"], p["beta1"],
                                       p["bff2"], p["g2"], p["beta2"]], 0)
                      for p in params])

    operands = (x2d, attn_bias, wqkv, bqkv, wo, w1, bff1, w2, vecs)

    def full_spec(shape):
        nd = len(shape)
        return pl.BlockSpec(shape, lambda i, nd=nd: (0,) * nd)

    out2d = pl.pallas_call(
        _encoder_kernel,
        out_shape=jax.ShapeDtypeStruct((BS, D), jnp.float32),
        grid=(1,),
        in_specs=[full_spec(op.shape) for op in operands],
        out_specs=full_spec((BS, D)),
        compiler_params=pltpu.CompilerParams(dimension_semantics=("arbitrary",)),
    )(*operands)
    return out2d.reshape(B, S, D)


# ------------------------------ pure-JAX reference ----------------------------
def encoder_layer_ref(x, mask, p):
    B, S, D = x.shape

    def dense(inp, w, b):
        return inp @ w + b

    def layernorm(inp, g, b):
        mean = jnp.mean(inp, -1, keepdims=True)
        var = jnp.sum((inp - mean) ** 2, -1, keepdims=True) / (inp.shape[-1] - 1)
        return g * (inp - mean) / (jnp.sqrt(var) + EPS) + b

    def split_heads(t):
        return t.reshape(B, S, NUM_HEADS, HEAD_DIM).transpose(0, 2, 1, 3)

    q = split_heads(dense(x, p["wq"], p["bq"]))
    k = split_heads(dense(x, p["wk"], p["bk"]))
    v = split_heads(dense(x, p["wv"], p["bv"]))
    scores = jnp.einsum("bhqd,bhkd->bhqk", q, k) / math.sqrt(HEAD_DIM)
    scores = jnp.where(mask[:, None, :, :] == 0.0, NEG_INF, scores)
    attn = jax.nn.softmax(scores, axis=-1)
    o = jnp.einsum("bhqk,bhkd->bhqd", attn, v).transpose(0, 2, 1, 3).reshape(B, S, D)
    o = dense(o, p["wo"], p["bo"])
    x1 = layernorm(x + o, p["g1"], p["beta1"])
    h1 = dense(x1, p["w1"], p["bff1"])
    cdf = 0.5 * (1.0 + jnp.tanh(SQRT_2_OVER_PI * (h1 + 0.044715 * h1 ** 3)))
    ff = dense(h1 * cdf, p["w2"], p["bff2"])
    return layernorm(x1 + ff, p["g2"], p["beta2"])


def encoder_ref(x, mask, params):
    for p in params:
        x = encoder_layer_ref(x, mask, p)
    return x


# ------------------------------ parameter init --------------------------------
def _linear_init(key, fan_in, fan_out):
    k1, k2 = jax.random.split(key)
    bound = 1.0 / math.sqrt(fan_in)
    w = jax.random.uniform(k1, (fan_in, fan_out), jnp.float32, -bound, bound)
    b = jax.random.uniform(k2, (1, fan_out), jnp.float32, -bound, bound)
    return w, b


def init_layer_params(key):
    keys = jax.random.split(key, 6)
    wq, bq = _linear_init(keys[0], HIDDEN, HIDDEN)
    wk, bk = _linear_init(keys[1], HIDDEN, HIDDEN)
    wv, bv = _linear_init(keys[2], HIDDEN, HIDDEN)
    wo, bo = _linear_init(keys[3], HIDDEN, HIDDEN)
    w1, bff1 = _linear_init(keys[4], HIDDEN, FF_HIDDEN)
    w2, bff2 = _linear_init(keys[5], FF_HIDDEN, HIDDEN)
    ones = jnp.ones((1, HIDDEN), jnp.float32)
    zeros = jnp.zeros((1, HIDDEN), jnp.float32)
    return dict(wq=wq, bq=bq, wk=wk, bk=bk, wv=wv, bv=bv, wo=wo, bo=bo,
                g1=ones, beta1=zeros, w1=w1, bff1=bff1, w2=w2, bff2=bff2,
                g2=ones, beta2=zeros)


# ------------------------------ main ------------------------------------------
if __name__ == "__main__":
    root = jax.random.PRNGKey(0)
    kx, kp = jax.random.split(root)

    x = jax.random.normal(kx, (BATCH, SEQ, HIDDEN), jnp.float32)

    # mask: (batch, 1, seq); 0 => key position masked.  Mask the last 2 tokens
    # of batch element 1 to exercise the masking path.
    mask_np = np.ones((BATCH, 1, SEQ), np.float32)
    mask_np[1, 0, -2:] = 0.0
    mask = jnp.asarray(mask_np)

    params = [init_layer_params(k) for k in jax.random.split(kp, NUM_LAYERS)]

    out = encoder_pallas(x, mask, params)
    out = jax.block_until_ready(out)

    ref = jax.block_until_ready(encoder_ref(x, mask, params))
    np.testing.assert_allclose(np.asarray(out), np.asarray(ref), rtol=2e-4, atol=2e-4)

    print("KERNEL_OK")
</pallas_src>

<mosaic_0001>
module attributes {stable_mosaic.version = 11 : i64} {
  func.func @_encoder_kernel(%arg0: i32, %arg1: memref<16x32xf32, #tpu.memory_space<vmem>>, %arg2: memref<16x16xf32, #tpu.memory_space<vmem>>, %arg3: memref<2x32x96xf32, #tpu.memory_space<vmem>>, %arg4: memref<2x1x96xf32, #tpu.memory_space<vmem>>, %arg5: memref<2x32x32xf32, #tpu.memory_space<vmem>>, %arg6: memref<2x32x64xf32, #tpu.memory_space<vmem>>, %arg7: memref<2x1x64xf32, #tpu.memory_space<vmem>>, %arg8: memref<2x64x32xf32, #tpu.memory_space<vmem>>, %arg9: memref<2x6x32xf32, #tpu.memory_space<vmem>>, %arg10: memref<16x32xf32, #tpu.memory_space<vmem>>) attributes {dimension_semantics = [#tpu.dimension_semantics<arbitrary>], iteration_bounds = array<i64: 1>, scalar_prefetch = 0 : i64, scratch_operands = 0 : i64, tpu.core_type = #tpu.core_type<tc>, window_params = [{pipeline_mode = #tpu.pipeline_mode<synchronous>, transform_indices = @transform_0, window_bounds = array<i64: 16, 32>}, {pipeline_mode = #tpu.pipeline_mode<synchronous>, transform_indices = @transform_1, window_bounds = array<i64: 16, 16>}, {pipeline_mode = #tpu.pipeline_mode<synchronous>, transform_indices = @transform_2, window_bounds = array<i64: 2, 32, 96>}, {pipeline_mode = #tpu.pipeline_mode<synchronous>, transform_indices = @transform_3, window_bounds = array<i64: 2, 1, 96>}, {pipeline_mode = #tpu.pipeline_mode<synchronous>, transform_indices = @transform_4, window_bounds = array<i64: 2, 32, 32>}, {pipeline_mode = #tpu.pipeline_mode<synchronous>, transform_indices = @transform_5, window_bounds = array<i64: 2, 32, 64>}, {pipeline_mode = #tpu.pipeline_mode<synchronous>, transform_indices = @transform_6, window_bounds = array<i64: 2, 1, 64>}, {pipeline_mode = #tpu.pipeline_mode<synchronous>, transform_indices = @transform_7, window_bounds = array<i64: 2, 64, 32>}, {pipeline_mode = #tpu.pipeline_mode<synchronous>, transform_indices = @transform_8, window_bounds = array<i64: 2, 6, 32>}, {pipeline_mode = #tpu.pipeline_mode<synchronous>, transform_indices = @transform_9, window_bounds = array<i64: 16, 32>}]} {
    %c0 = arith.constant 0 : index
    %c0_0 = arith.constant 0 : index
    %0 = vector.load %arg1[%c0, %c0_0] : memref<16x32xf32, #tpu.memory_space<vmem>>, vector<16x32xf32>
    %c0_1 = arith.constant 0 : index
    %c0_2 = arith.constant 0 : index
    %1 = vector.load %arg2[%c0_1, %c0_2] : memref<16x16xf32, #tpu.memory_space<vmem>>, vector<16x16xf32>
    %c0_3 = arith.constant 0 : index
    %c0_4 = arith.constant 0 : index
    %c0_5 = arith.constant 0 : index
    %2 = vector.load %arg3[%c0_3, %c0_4, %c0_5] : memref<2x32x96xf32, #tpu.memory_space<vmem>>, vector<1x32x96xf32>
    %3 = vector.shape_cast %2 : vector<1x32x96xf32> to vector<32x96xf32>
    %c0_6 = arith.constant 0 : index
    %c0_7 = arith.constant 0 : index
    %c0_8 = arith.constant 0 : index
    %4 = vector.load %arg4[%c0_6, %c0_7, %c0_8] : memref<2x1x96xf32, #tpu.memory_space<vmem>>, vector<1x1x96xf32>
    %5 = vector.shape_cast %4 : vector<1x1x96xf32> to vector<1x96xf32>
    %c0_9 = arith.constant 0 : index
    %c0_10 = arith.constant 0 : index
    %c0_11 = arith.constant 0 : index
    %6 = vector.load %arg5[%c0_9, %c0_10, %c0_11] : memref<2x32x32xf32, #tpu.memory_space<vmem>>, vector<1x32x32xf32>
    %7 = vector.shape_cast %6 : vector<1x32x32xf32> to vector<32x32xf32>
    %c0_12 = arith.constant 0 : index
    %c0_13 = arith.constant 0 : index
    %c0_14 = arith.constant 0 : index
    %8 = vector.load %arg6[%c0_12, %c0_13, %c0_14] : memref<2x32x64xf32, #tpu.memory_space<vmem>>, vector<1x32x64xf32>
    %9 = vector.shape_cast %8 : vector<1x32x64xf32> to vector<32x64xf32>
    %c0_15 = arith.constant 0 : index
    %c0_16 = arith.constant 0 : index
    %c0_17 = arith.constant 0 : index
    %10 = vector.load %arg7[%c0_15, %c0_16, %c0_17] : memref<2x1x64xf32, #tpu.memory_space<vmem>>, vector<1x1x64xf32>
    %11 = vector.shape_cast %10 : vector<1x1x64xf32> to vector<1x64xf32>
    %c0_18 = arith.constant 0 : index
    %c0_19 = arith.constant 0 : index
    %c0_20 = arith.constant 0 : index
    %12 = vector.load %arg8[%c0_18, %c0_19, %c0_20] : memref<2x64x32xf32, #tpu.memory_space<vmem>>, vector<1x64x32xf32>
    %13 = vector.shape_cast %12 : vector<1x64x32xf32> to vector<64x32xf32>
    %c0_21 = arith.constant 0 : index
    %c0_22 = arith.constant 0 : index
    %c0_23 = arith.constant 0 : index
    %14 = vector.load %arg9[%c0_21, %c0_22, %c0_23] : memref<2x6x32xf32, #tpu.memory_space<vmem>>, vector<1x6x32xf32>
    %15 = vector.shape_cast %14 : vector<1x6x32xf32> to vector<6x32xf32>
    %16 = vector.extract_strided_slice %15 {offsets = [0, 0], sizes = [1, 32], strides = [1, 1]} : vector<6x32xf32> to vector<1x32xf32>
    %17 = vector.extract_strided_slice %15 {offsets = [1, 0], sizes = [1, 32], strides = [1, 1]} : vector<6x32xf32> to vector<1x32xf32>
    %18 = vector.extract_strided_slice %15 {offsets = [2, 0], sizes = [1, 32], strides = [1, 1]} : vector<6x32xf32> to vector<1x32xf32>
    %19 = vector.extract_strided_slice %15 {offsets = [3, 0], sizes = [1, 32], strides = [1, 1]} : vector<6x32xf32> to vector<1x32xf32>
    %20 = vector.extract_strided_slice %15 {offsets = [4, 0], sizes = [1, 32], strides = [1, 1]} : vector<6x32xf32> to vector<1x32xf32>
    %21 = vector.extract_strided_slice %15 {offsets = [5, 0], sizes = [1, 32], strides = [1, 1]} : vector<6x32xf32> to vector<1x32xf32>
    %cst = arith.constant dense<0.000000e+00> : vector<16x96xf32>
    %22 = tpu.matmul %0, %3, %cst {dimension_numbers = #tpu.dot_dimension_numbers<[1], [0], [0], [1], [0, 0, 1, 1], [], []>} : vector<16x32xf32>, vector<32x96xf32>, vector<16x96xf32> -> vector<16x96xf32>
    %23 = vector.broadcast %5 : vector<1x96xf32> to vector<16x96xf32>
    %24 = arith.addf %22, %23 : vector<16x96xf32>
    %cst_24 = arith.constant 0.000000e+00 : f32
    %25 = vector.broadcast %cst_24 : f32 to vector<16x32xf32>
    %26 = vector.extract_strided_slice %24 {offsets = [0, 0], sizes = [16, 8], strides = [1, 1]} : vector<16x96xf32> to vector<16x8xf32>
    %27 = vector.extract_strided_slice %24 {offsets = [0, 32], sizes = [16, 8], strides = [1, 1]} : vector<16x96xf32> to vector<16x8xf32>
    %28 = vector.extract_strided_slice %24 {offsets = [0, 64], sizes = [16, 8], strides = [1, 1]} : vector<16x96xf32> to vector<16x8xf32>
    %cst_25 = arith.constant dense<0.000000e+00> : vector<16x16xf32>
    %29 = tpu.matmul %26, %27, %cst_25 {dimension_numbers = #tpu.dot_dimension_numbers<[1], [1], [0], [0], [0, 0, 1, 0], [], []>} : vector<16x8xf32>, vector<16x8xf32>, vector<16x16xf32> -> vector<16x16xf32>
    %cst_26 = arith.constant 0.353553385 : f32
    %30 = vector.broadcast %cst_26 : f32 to vector<16x16xf32>
    %31 = arith.mulf %29, %30 : vector<16x16xf32>
    %32 = arith.addf %31, %1 : vector<16x16xf32>
    %cst_27 = arith.constant dense<0xFF800000> : vector<16xf32>
    %33 = vector.multi_reduction <maximumf>, %32, %cst_27 [1] : vector<16x16xf32> to vector<16xf32>
    %34 = vector.shape_cast %33 : vector<16xf32> to vector<16x1xf32>
    %35 = vector.broadcast %34 : vector<16x1xf32> to vector<16x16xf32>
    %36 = arith.subf %32, %35 : vector<16x16xf32>
    %37 = math.exp %36 : vector<16x16xf32>
    %cst_28 = arith.constant dense<0.000000e+00> : vector<16xf32>
    %38 = vector.multi_reduction <add>, %37, %cst_28 [1] : vector<16x16xf32> to vector<16xf32>
    %39 = vector.shape_cast %38 : vector<16xf32> to vector<16x1xf32>
    %40 = tpu.reciprocal %39 : vector<16x1xf32> -> vector<16x1xf32>
    %41 = vector.broadcast %40 : vector<16x1xf32> to vector<16x16xf32>
    %42 = arith.mulf %37, %41 : vector<16x16xf32>
    %cst_29 = arith.constant dense<0.000000e+00> : vector<16x8xf32>
    %43 = tpu.matmul %42, %28, %cst_29 {dimension_numbers = #tpu.dot_dimension_numbers<[1], [0], [0], [1], [0, 0, 1, 1], [], []>} : vector<16x16xf32>, vector<16x8xf32>, vector<16x8xf32> -> vector<16x8xf32>
    %44 = vector.extract_strided_slice %7 {offsets = [0, 0], sizes = [8, 32], strides = [1, 1]} : vector<32x32xf32> to vector<8x32xf32>
    %cst_30 = arith.constant dense<0.000000e+00> : vector<16x32xf32>
    %45 = tpu.matmul %43, %44, %cst_30 {dimension_numbers = #tpu.dot_dimension_numbers<[1], [0], [0], [1], [0, 0, 1, 1], [], []>} : vector<16x8xf32>, vector<8x32xf32>, vector<16x32xf32> -> vector<16x32xf32>
    %46 = arith.addf %25, %45 : vector<16x32xf32>
    %47 = vector.extract_strided_slice %24 {offsets = [0, 8], sizes = [16, 8], strides = [1, 1]} : vector<16x96xf32> to vector<16x8xf32>
    %48 = vector.extract_strided_slice %24 {offsets = [0, 40], sizes = [16, 8], strides = [1, 1]} : vector<16x96xf32> to vector<16x8xf32>
    %49 = vector.extract_strided_slice %24 {offsets = [0, 72], sizes = [16, 8], strides = [1, 1]} : vector<16x96xf32> to vector<16x8xf32>
    %cst_31 = arith.constant dense<0.000000e+00> : vector<16x16xf32>
    %50 = tpu.matmul %47, %48, %cst_31 {dimension_numbers = #tpu.dot_dimension_numbers<[1], [1], [0], [0], [0, 0, 1, 0], [], []>} : vector<16x8xf32>, vector<16x8xf32>, vector<16x16xf32> -> vector<16x16xf32>
    %cst_32 = arith.constant 0.353553385 : f32
    %51 = vector.broadcast %cst_32 : f32 to vector<16x16xf32>
    %52 = arith.mulf %50, %51 : vector<16x16xf32>
    %53 = arith.addf %52, %1 : vector<16x16xf32>
    %cst_33 = arith.constant dense<0xFF800000> : vector<16xf32>
    %54 = vector.multi_reduction <maximumf>, %53, %cst_33 [1] : vector<16x16xf32> to vector<16xf32>
    %55 = vector.shape_cast %54 : vector<16xf32> to vector<16x1xf32>
    %56 = vector.broadcast %55 : vector<16x1xf32> to vector<16x16xf32>
    %57 = arith.subf %53, %56 : vector<16x16xf32>
    %58 = math.exp %57 : vector<16x16xf32>
    %cst_34 = arith.constant dense<0.000000e+00> : vector<16xf32>
    %59 = vector.multi_reduction <add>, %58, %cst_34 [1] : vector<16x16xf32> to vector<16xf32>
    %60 = vector.shape_cast %59 : vector<16xf32> to vector<16x1xf32>
    %61 = tpu.reciprocal %60 : vector<16x1xf32> -> vector<16x1xf32>
    %62 = vector.broadcast %61 : vector<16x1xf32> to vector<16x16xf32>
    %63 = arith.mulf %58, %62 : vector<16x16xf32>
    %cst_35 = arith.constant dense<0.000000e+00> : vector<16x8xf32>
    %64 = tpu.matmul %63, %49, %cst_35 {dimension_numbers = #tpu.dot_dimension_numbers<[1], [0], [0], [1], [0, 0, 1, 1], [], []>} : vector<16x16xf32>, vector<16x8xf32>, vector<16x8xf32> -> vector<16x8xf32>
    %65 = vector.extract_strided_slice %7 {offsets = [8, 0], sizes = [8, 32], strides = [1, 1]} : vector<32x32xf32> to vector<8x32xf32>
    %cst_36 = arith.constant dense<0.000000e+00> : vector<16x32xf32>
    %66 = tpu.matmul %64, %65, %cst_36 {dimension_numbers = #tpu.dot_dimension_numbers<[1], [0], [0], [1], [0, 0, 1, 1], [], []>} : vector<16x8xf32>, vector<8x32xf32>, vector<16x32xf32> -> vector<16x32xf32>
    %67 = arith.addf %46, %66 : vector<16x32xf32>
    %68 = vector.extract_strided_slice %24 {offsets = [0, 16], sizes = [16, 8], strides = [1, 1]} : vector<16x96xf32> to vector<16x8xf32>
    %69 = vector.extract_strided_slice %24 {offsets = [0, 48], sizes = [16, 8], strides = [1, 1]} : vector<16x96xf32> to vector<16x8xf32>
    %70 = vector.extract_strided_slice %24 {offsets = [0, 80], sizes = [16, 8], strides = [1, 1]} : vector<16x96xf32> to vector<16x8xf32>
    %cst_37 = arith.constant dense<0.000000e+00> : vector<16x16xf32>
    %71 = tpu.matmul %68, %69, %cst_37 {dimension_numbers = #tpu.dot_dimension_numbers<[1], [1], [0], [0], [0, 0, 1, 0], [], []>} : vector<16x8xf32>, vector<16x8xf32>, vector<16x16xf32> -> vector<16x16xf32>
    %cst_38 = arith.constant 0.353553385 : f32
    %72 = vector.broadcast %cst_38 : f32 to vector<16x16xf32>
    %73 = arith.mulf %71, %72 : vector<16x16xf32>
    %74 = arith.addf %73, %1 : vector<16x16xf32>
    %cst_39 = arith.constant dense<0xFF800000> : vector<16xf32>
    %75 = vector.multi_reduction <maximumf>, %74, %cst_39 [1] : vector<16x16xf32> to vector<16xf32>
    %76 = vector.shape_cast %75 : vector<16xf32> to vector<16x1xf32>
    %77 = vector.broadcast %76 : vector<16x1xf32> to vector<16x16xf32>
    %78 = arith.subf %74, %77 : vector<16x16xf32>
    %79 = math.exp %78 : vector<16x16xf32>
    %cst_40 = arith.constant dense<0.000000e+00> : vector<16xf32>
    %80 = vector.multi_reduction <add>, %79, %cst_40 [1] : vector<16x16xf32> to vector<16xf32>
    %81 = vector.shape_cast %80 : vector<16xf32> to vector<16x1xf32>
    %82 = tpu.reciprocal %81 : vector<16x1xf32> -> vector<16x1xf32>
    %83 = vector.broadcast %82 : vector<16x1xf32> to vector<16x16xf32>
    %84 = arith.mulf %79, %83 : vector<16x16xf32>
    %cst_41 = arith.constant dense<0.000000e+00> : vector<16x8xf32>
    %85 = tpu.matmul %84, %70, %cst_41 {dimension_numbers = #tpu.dot_dimension_numbers<[1], [0], [0], [1], [0, 0, 1, 1], [], []>} : vector<16x16xf32>, vector<16x8xf32>, vector<16x8xf32> -> vector<16x8xf32>
    %86 = vector.extract_strided_slice %7 {offsets = [16, 0], sizes = [8, 32], strides = [1, 1]} : vector<32x32xf32> to vector<8x32xf32>
    %cst_42 = arith.constant dense<0.000000e+00> : vector<16x32xf32>
    %87 = tpu.matmul %85, %86, %cst_42 {dimension_numbers = #tpu.dot_dimension_numbers<[1], [0], [0], [1], [0, 0, 1, 1], [], []>} : vector<16x8xf32>, vector<8x32xf32>, vector<16x32xf32> -> vector<16x32xf32>
    %88 = arith.addf %67, %87 : vector<16x32xf32>
    %89 = vector.extract_strided_slice %24 {offsets = [0, 24], sizes = [16, 8], strides = [1, 1]} : vector<16x96xf32> to vector<16x8xf32>
    %90 = vector.extract_strided_slice %24 {offsets = [0, 56], sizes = [16, 8], strides = [1, 1]} : vector<16x96xf32> to vector<16x8xf32>
    %91 = vector.extract_strided_slice %24 {offsets = [0, 88], sizes = [16, 8], strides = [1, 1]} : vector<16x96xf32> to vector<16x8xf32>
    %cst_43 = arith.constant dense<0.000000e+00> : vector<16x16xf32>
    %92 = tpu.matmul %89, %90, %cst_43 {dimension_numbers = #tpu.dot_dimension_numbers<[1], [1], [0], [0], [0, 0, 1, 0], [], []>} : vector<16x8xf32>, vector<16x8xf32>, vector<16x16xf32> -> vector<16x16xf32>
    %cst_44 = arith.constant 0.353553385 : f32
    %93 = vector.broadcast %cst_44 : f32 to vector<16x16xf32>
    %94 = arith.mulf %92, %93 : vector<16x16xf32>
    %95 = arith.addf %94, %1 : vector<16x16xf32>
    %cst_45 = arith.constant dense<0xFF800000> : vector<16xf32>
    %96 = vector.multi_reduction <maximumf>, %95, %cst_45 [1] : vector<16x16xf32> to vector<16xf32>
    %97 = vector.shape_cast %96 : vector<16xf32> to vector<16x1xf32>
    %98 = vector.broadcast %97 : vector<16x1xf32> to vector<16x16xf32>
    %99 = arith.subf %95, %98 : vector<16x16xf32>
    %100 = math.exp %99 : vector<16x16xf32>
    %cst_46 = arith.constant dense<0.000000e+00> : vector<16xf32>
    %101 = vector.multi_reduction <add>, %100, %cst_46 [1] : vector<16x16xf32> to vector<16xf32>
    %102 = vector.shape_cast %101 : vector<16xf32> to vector<16x1xf32>
    %103 = tpu.reciprocal %102 : vector<16x1xf32> -> vector<16x1xf32>
    %104 = vector.broadcast %103 : vector<16x1xf32> to vector<16x16xf32>
    %105 = arith.mulf %100, %104 : vector<16x16xf32>
    %cst_47 = arith.constant dense<0.000000e+00> : vector<16x8xf32>
    %106 = tpu.matmul %105, %91, %cst_47 {dimension_numbers = #tpu.dot_dimension_numbers<[1], [0], [0], [1], [0, 0, 1, 1], [], []>} : vector<16x16xf32>, vector<16x8xf32>, vector<16x8xf32> -> vector<16x8xf32>
    %107 = vector.extract_strided_slice %7 {offsets = [24, 0], sizes = [8, 32], strides = [1, 1]} : vector<32x32xf32> to vector<8x32xf32>
    %cst_48 = arith.constant dense<0.000000e+00> : vector<16x32xf32>
    %108 = tpu.matmul %106, %107, %cst_48 {dimension_numbers = #tpu.dot_dimension_numbers<[1], [0], [0], [1], [0, 0, 1, 1], [], []>} : vector<16x8xf32>, vector<8x32xf32>, vector<16x32xf32> -> vector<16x32xf32>
    %109 = arith.addf %88, %108 : vector<16x32xf32>
    %110 = vector.broadcast %16 : vector<1x32xf32> to vector<16x32xf32>
    %111 = arith.addf %109, %110 : vector<16x32xf32>
    %112 = arith.addf %0, %111 : vector<16x32xf32>
    %cst_49 = arith.constant dense<0.000000e+00> : vector<16xf32>
    %113 = vector.multi_reduction <add>, %112, %cst_49 [1] : vector<16x32xf32> to vector<16xf32>
    %114 = vector.shape_cast %113 : vector<16xf32> to vector<16x1xf32>
    %cst_50 = arith.constant 3.200000e+01 : f32
    %115 = vector.broadcast %cst_50 : f32 to vector<16x1xf32>
    %116 = arith.divf %114, %115 : vector<16x1xf32>
    %117 = vector.broadcast %116 : vector<16x1xf32> to vector<16x32xf32>
    %118 = arith.subf %112, %117 : vector<16x32xf32>
    %119 = arith.mulf %118, %118 : vector<16x32xf32>
    %cst_51 = arith.constant dense<0.000000e+00> : vector<16xf32>
    %120 = vector.multi_reduction <add>, %119, %cst_51 [1] : vector<16x32xf32> to vector<16xf32>
    %121 = vector.shape_cast %120 : vector<16xf32> to vector<16x1xf32>
    %cst_52 = arith.constant 3.100000e+01 : f32
    %122 = vector.broadcast %cst_52 : f32 to vector<16x1xf32>
    %123 = arith.divf %121, %122 : vector<16x1xf32>
    %124 = math.sqrt %123 : vector<16x1xf32>
    %cst_53 = arith.constant 9.99999997E-7 : f32
    %125 = vector.broadcast %cst_53 : f32 to vector<16x1xf32>
    %126 = arith.addf %124, %125 : vector<16x1xf32>
    %127 = tpu.reciprocal %126 : vector<16x1xf32> -> vector<16x1xf32>
    %128 = vector.broadcast %116 : vector<16x1xf32> to vector<16x32xf32>
    %129 = arith.subf %112, %128 : vector<16x32xf32>
    %130 = vector.broadcast %17 : vector<1x32xf32> to vector<16x32xf32>
    %131 = arith.mulf %130, %129 : vector<16x32xf32>
    %132 = vector.broadcast %127 : vector<16x1xf32> to vector<16x32xf32>
    %133 = arith.mulf %131, %132 : vector<16x32xf32>
    %134 = vector.broadcast %18 : vector<1x32xf32> to vector<16x32xf32>
    %135 = arith.addf %133, %134 : vector<16x32xf32>
    %cst_54 = arith.constant dense<0.000000e+00> : vector<16x64xf32>
    %136 = tpu.matmul %135, %9, %cst_54 {dimension_numbers = #tpu.dot_dimension_numbers<[1], [0], [0], [1], [0, 0, 1, 1], [], []>} : vector<16x32xf32>, vector<32x64xf32>, vector<16x64xf32> -> vector<16x64xf32>
    %137 = vector.broadcast %11 : vector<1x64xf32> to vector<16x64xf32>
    %138 = arith.addf %136, %137 : vector<16x64xf32>
    %139 = arith.mulf %138, %138 : vector<16x64xf32>
    %140 = arith.mulf %138, %139 : vector<16x64xf32>
    %cst_55 = arith.constant 4.471500e-02 : f32
    %141 = vector.broadcast %cst_55 : f32 to vector<16x64xf32>
    %142 = arith.mulf %141, %140 : vector<16x64xf32>
    %143 = arith.addf %138, %142 : vector<16x64xf32>
    %cst_56 = arith.constant 0.797884583 : f32
    %144 = vector.broadcast %cst_56 : f32 to vector<16x64xf32>
    %145 = arith.mulf %144, %143 : vector<16x64xf32>
    %146 = math.tanh %145 : vector<16x64xf32>
    %cst_57 = arith.constant 1.000000e+00 : f32
    %147 = vector.broadcast %cst_57 : f32 to vector<16x64xf32>
    %148 = arith.addf %147, %146 : vector<16x64xf32>
    %cst_58 = arith.constant 5.000000e-01 : f32
    %149 = vector.broadcast %cst_58 : f32 to vector<16x64xf32>
    %150 = arith.mulf %149, %148 : vector<16x64xf32>
    %151 = arith.mulf %138, %150 : vector<16x64xf32>
    %cst_59 = arith.constant dense<0.000000e+00> : vector<16x32xf32>
    %152 = tpu.matmul %151, %13, %cst_59 {dimension_numbers = #tpu.dot_dimension_numbers<[1], [0], [0], [1], [0, 0, 1, 1], [], []>} : vector<16x64xf32>, vector<64x32xf32>, vector<16x32xf32> -> vector<16x32xf32>
    %153 = vector.broadcast %19 : vector<1x32xf32> to vector<16x32xf32>
    %154 = arith.addf %152, %153 : vector<16x32xf32>
    %155 = arith.addf %135, %154 : vector<16x32xf32>
    %cst_60 = arith.constant dense<0.000000e+00> : vector<16xf32>
    %156 = vector.multi_reduction <add>, %155, %cst_60 [1] : vector<16x32xf32> to vector<16xf32>
    %157 = vector.shape_cast %156 : vector<16xf32> to vector<16x1xf32>
    %cst_61 = arith.constant 3.200000e+01 : f32
    %158 = vector.broadcast %cst_61 : f32 to vector<16x1xf32>
    %159 = arith.divf %157, %158 : vector<16x1xf32>
    %160 = vector.broadcast %159 : vector<16x1xf32> to vector<16x32xf32>
    %161 = arith.subf %155, %160 : vector<16x32xf32>
    %162 = arith.mulf %161, %161 : vector<16x32xf32>
    %cst_62 = arith.constant dense<0.000000e+00> : vector<16xf32>
    %163 = vector.multi_reduction <add>, %162, %cst_62 [1] : vector<16x32xf32> to vector<16xf32>
    %164 = vector.shape_cast %163 : vector<16xf32> to vector<16x1xf32>
    %cst_63 = arith.constant 3.100000e+01 : f32
    %165 = vector.broadcast %cst_63 : f32 to vector<16x1xf32>
    %166 = arith.divf %164, %165 : vector<16x1xf32>
    %167 = math.sqrt %166 : vector<16x1xf32>
    %cst_64 = arith.constant 9.99999997E-7 : f32
    %168 = vector.broadcast %cst_64 : f32 to vector<16x1xf32>
    %169 = arith.addf %167, %168 : vector<16x1xf32>
    %170 = tpu.reciprocal %169 : vector<16x1xf32> -> vector<16x1xf32>
    %171 = vector.broadcast %159 : vector<16x1xf32> to vector<16x32xf32>
    %172 = arith.subf %155, %171 : vector<16x32xf32>
    %173 = vector.broadcast %20 : vector<1x32xf32> to vector<16x32xf32>
    %174 = arith.mulf %173, %172 : vector<16x32xf32>
    %175 = vector.broadcast %170 : vector<16x1xf32> to vector<16x32xf32>
    %176 = arith.mulf %174, %175 : vector<16x32xf32>
    %177 = vector.broadcast %21 : vector<1x32xf32> to vector<16x32xf32>
    %178 = arith.addf %176, %177 : vector<16x32xf32>
    %c1 = arith.constant 1 : index
    %c0_65 = arith.constant 0 : index
    %c0_66 = arith.constant 0 : index
    %179 = vector.load %arg3[%c1, %c0_65, %c0_66] : memref<2x32x96xf32, #tpu.memory_space<vmem>>, vector<1x32x96xf32>
    %180 = vector.shape_cast %179 : vector<1x32x96xf32> to vector<32x96xf32>
    %c1_67 = arith.constant 1 : index
    %c0_68 = arith.constant 0 : index
    %c0_69 = arith.constant 0 : index
    %181 = vector.load %arg4[%c1_67, %c0_68, %c0_69] : memref<2x1x96xf32, #tpu.memory_space<vmem>>, vector<1x1x96xf32>
    %182 = vector.shape_cast %181 : vector<1x1x96xf32> to vector<1x96xf32>
    %c1_70 = arith.constant 1 : index
    %c0_71 = arith.constant 0 : index
    %c0_72 = arith.constant 0 : index
    %183 = vector.load %arg5[%c1_70, %c0_71, %c0_72] : memref<2x32x32xf32, #tpu.memory_space<vmem>>, vector<1x32x32xf32>
    %184 = vector.shape_cast %183 : vector<1x32x32xf32> to vector<32x32xf32>
    %c1_73 = arith.constant 1 : index
    %c0_74 = arith.constant 0 : index
    %c0_75 = arith.constant 0 : index
    %185 = vector.load %arg6[%c1_73, %c0_74, %c0_75] : memref<2x32x64xf32, #tpu.memory_space<vmem>>, vector<1x32x64xf32>
    %186 = vector.shape_cast %185 : vector<1x32x64xf32> to vector<32x64xf32>
    %c1_76 = arith.constant 1 : index
    %c0_77 = arith.constant 0 : index
    %c0_78 = arith.constant 0 : index
    %187 = vector.load %arg7[%c1_76, %c0_77, %c0_78] : memref<2x1x64xf32, #tpu.memory_space<vmem>>, vector<1x1x64xf32>
    %188 = vector.shape_cast %187 : vector<1x1x64xf32> to vector<1x64xf32>
    %c1_79 = arith.constant 1 : index
    %c0_80 = arith.constant 0 : index
    %c0_81 = arith.constant 0 : index
    %189 = vector.load %arg8[%c1_79, %c0_80, %c0_81] : memref<2x64x32xf32, #tpu.memory_space<vmem>>, vector<1x64x32xf32>
    %190 = vector.shape_cast %189 : vector<1x64x32xf32> to vector<64x32xf32>
    %c1_82 = arith.constant 1 : index
    %c0_83 = arith.constant 0 : index
    %c0_84 = arith.constant 0 : index
    %191 = vector.load %arg9[%c1_82, %c0_83, %c0_84] : memref<2x6x32xf32, #tpu.memory_space<vmem>>, vector<1x6x32xf32>
    %192 = vector.shape_cast %191 : vector<1x6x32xf32> to vector<6x32xf32>
    %193 = vector.extract_strided_slice %192 {offsets = [0, 0], sizes = [1, 32], strides = [1, 1]} : vector<6x32xf32> to vector<1x32xf32>
    %194 = vector.extract_strided_slice %192 {offsets = [1, 0], sizes = [1, 32], strides = [1, 1]} : vector<6x32xf32> to vector<1x32xf32>
    %195 = vector.extract_strided_slice %192 {offsets = [2, 0], sizes = [1, 32], strides = [1, 1]} : vector<6x32xf32> to vector<1x32xf32>
    %196 = vector.extract_strided_slice %192 {offsets = [3, 0], sizes = [1, 32], strides = [1, 1]} : vector<6x32xf32> to vector<1x32xf32>
    %197 = vector.extract_strided_slice %192 {offsets = [4, 0], sizes = [1, 32], strides = [1, 1]} : vector<6x32xf32> to vector<1x32xf32>
    %198 = vector.extract_strided_slice %192 {offsets = [5, 0], sizes = [1, 32], strides = [1, 1]} : vector<6x32xf32> to vector<1x32xf32>
    %cst_85 = arith.constant dense<0.000000e+00> : vector<16x96xf32>
    %199 = tpu.matmul %178, %180, %cst_85 {dimension_numbers = #tpu.dot_dimension_numbers<[1], [0], [0], [1], [0, 0, 1, 1], [], []>} : vector<16x32xf32>, vector<32x96xf32>, vector<16x96xf32> -> vector<16x96xf32>
    %200 = vector.broadcast %182 : vector<1x96xf32> to vector<16x96xf32>
    %201 = arith.addf %199, %200 : vector<16x96xf32>
    %cst_86 = arith.constant 0.000000e+00 : f32
    %202 = vector.broadcast %cst_86 : f32 to vector<16x32xf32>
    %203 = vector.extract_strided_slice %201 {offsets = [0, 0], sizes = [16, 8], strides = [1, 1]} : vector<16x96xf32> to vector<16x8xf32>
    %204 = vector.extract_strided_slice %201 {offsets = [0, 32], sizes = [16, 8], strides = [1, 1]} : vector<16x96xf32> to vector<16x8xf32>
    %205 = vector.extract_strided_slice %201 {offsets = [0, 64], sizes = [16, 8], strides = [1, 1]} : vector<16x96xf32> to vector<16x8xf32>
    %cst_87 = arith.constant dense<0.000000e+00> : vector<16x16xf32>
    %206 = tpu.matmul %203, %204, %cst_87 {dimension_numbers = #tpu.dot_dimension_numbers<[1], [1], [0], [0], [0, 0, 1, 0], [], []>} : vector<16x8xf32>, vector<16x8xf32>, vector<16x16xf32> -> vector<16x16xf32>
    %cst_88 = arith.constant 0.353553385 : f32
    %207 = vector.broadcast %cst_88 : f32 to vector<16x16xf32>
    %208 = arith.mulf %206, %207 : vector<16x16xf32>
    %209 = arith.addf %208, %1 : vector<16x16xf32>
    %cst_89 = arith.constant dense<0xFF800000> : vector<16xf32>
    %210 = vector.multi_reduction <maximumf>, %209, %cst_89 [1] : vector<16x16xf32> to vector<16xf32>
    %211 = vector.shape_cast %210 : vector<16xf32> to vector<16x1xf32>
    %212 = vector.broadcast %211 : vector<16x1xf32> to vector<16x16xf32>
    %213 = arith.subf %209, %212 : vector<16x16xf32>
    %214 = math.exp %213 : vector<16x16xf32>
    %cst_90 = arith.constant dense<0.000000e+00> : vector<16xf32>
    %215 = vector.multi_reduction <add>, %214, %cst_90 [1] : vector<16x16xf32> to vector<16xf32>
    %216 = vector.shape_cast %215 : vector<16xf32> to vector<16x1xf32>
    %217 = tpu.reciprocal %216 : vector<16x1xf32> -> vector<16x1xf32>
    %218 = vector.broadcast %217 : vector<16x1xf32> to vector<16x16xf32>
    %219 = arith.mulf %214, %218 : vector<16x16xf32>
    %cst_91 = arith.constant dense<0.000000e+00> : vector<16x8xf32>
    %220 = tpu.matmul %219, %205, %cst_91 {dimension_numbers = #tpu.dot_dimension_numbers<[1], [0], [0], [1], [0, 0, 1, 1], [], []>} : vector<16x16xf32>, vector<16x8xf32>, vector<16x8xf32> -> vector<16x8xf32>
    %221 = vector.extract_strided_slice %184 {offsets = [0, 0], sizes = [8, 32], strides = [1, 1]} : vector<32x32xf32> to vector<8x32xf32>
    %cst_92 = arith.constant dense<0.000000e+00> : vector<16x32xf32>
    %222 = tpu.matmul %220, %221, %cst_92 {dimension_numbers = #tpu.dot_dimension_numbers<[1], [0], [0], [1], [0, 0, 1, 1], [], []>} : vector<16x8xf32>, vector<8x32xf32>, vector<16x32xf32> -> vector<16x32xf32>
    %223 = arith.addf %202, %222 : vector<16x32xf32>
    %224 = vector.extract_strided_slice %201 {offsets = [0, 8], sizes = [16, 8], strides = [1, 1]} : vector<16x96xf32> to vector<16x8xf32>
    %225 = vector.extract_strided_slice %201 {offsets = [0, 40], sizes = [16, 8], strides = [1, 1]} : vector<16x96xf32> to vector<16x8xf32>
    %226 = vector.extract_strided_slice %201 {offsets = [0, 72], sizes = [16, 8], strides = [1, 1]} : vector<16x96xf32> to vector<16x8xf32>
    %cst_93 = arith.constant dense<0.000000e+00> : vector<16x16xf32>
    %227 = tpu.matmul %224, %225, %cst_93 {dimension_numbers = #tpu.dot_dimension_numbers<[1], [1], [0], [0], [0, 0, 1, 0], [], []>} : vector<16x8xf32>, vector<16x8xf32>, vector<16x16xf32> -> vector<16x16xf32>
    %cst_94 = arith.constant 0.353553385 : f32
    %228 = vector.broadcast %cst_94 : f32 to vector<16x16xf32>
    %229 = arith.mulf %227, %228 : vector<16x16xf32>
    %230 = arith.addf %229, %1 : vector<16x16xf32>
    %cst_95 = arith.constant dense<0xFF800000> : vector<16xf32>
    %231 = vector.multi_reduction <maximumf>, %230, %cst_95 [1] : vector<16x16xf32> to vector<16xf32>
    %232 = vector.shape_cast %231 : vector<16xf32> to vector<16x1xf32>
    %233 = vector.broadcast %232 : vector<16x1xf32> to vector<16x16xf32>
    %234 = arith.subf %230, %233 : vector<16x16xf32>
    %235 = math.exp %234 : vector<16x16xf32>
    %cst_96 = arith.constant dense<0.000000e+00> : vector<16xf32>
    %236 = vector.multi_reduction <add>, %235, %cst_96 [1] : vector<16x16xf32> to vector<16xf32>
    %237 = vector.shape_cast %236 : vector<16xf32> to vector<16x1xf32>
    %238 = tpu.reciprocal %237 : vector<16x1xf32> -> vector<16x1xf32>
    %239 = vector.broadcast %238 : vector<16x1xf32> to vector<16x16xf32>
    %240 = arith.mulf %235, %239 : vector<16x16xf32>
    %cst_97 = arith.constant dense<0.000000e+00> : vector<16x8xf32>
    %241 = tpu.matmul %240, %226, %cst_97 {dimension_numbers = #tpu.dot_dimension_numbers<[1], [0], [0], [1], [0, 0, 1, 1], [], []>} : vector<16x16xf32>, vector<16x8xf32>, vector<16x8xf32> -> vector<16x8xf32>
    %242 = vector.extract_strided_slice %184 {offsets = [8, 0], sizes = [8, 32], strides = [1, 1]} : vector<32x32xf32> to vector<8x32xf32>
    %cst_98 = arith.constant dense<0.000000e+00> : vector<16x32xf32>
    %243 = tpu.matmul %241, %242, %cst_98 {dimension_numbers = #tpu.dot_dimension_numbers<[1], [0], [0], [1], [0, 0, 1, 1], [], []>} : vector<16x8xf32>, vector<8x32xf32>, vector<16x32xf32> -> vector<16x32xf32>
    %244 = arith.addf %223, %243 : vector<16x32xf32>
    %245 = vector.extract_strided_slice %201 {offsets = [0, 16], sizes = [16, 8], strides = [1, 1]} : vector<16x96xf32> to vector<16x8xf32>
    %246 = vector.extract_strided_slice %201 {offsets = [0, 48], sizes = [16, 8], strides = [1, 1]} : vector<16x96xf32> to vector<16x8xf32>
    %247 = vector.extract_strided_slice %201 {offsets = [0, 80], sizes = [16, 8], strides = [1, 1]} : vector<16x96xf32> to vector<16x8xf32>
    %cst_99 = arith.constant dense<0.000000e+00> : vector<16x16xf32>
    %248 = tpu.matmul %245, %246, %cst_99 {dimension_numbers = #tpu.dot_dimension_numbers<[1], [1], [0], [0], [0, 0, 1, 0], [], []>} : vector<16x8xf32>, vector<16x8xf32>, vector<16x16xf32> -> vector<16x16xf32>
    %cst_100 = arith.constant 0.353553385 : f32
    %249 = vector.broadcast %cst_100 : f32 to vector<16x16xf32>
    %250 = arith.mulf %248, %249 : vector<16x16xf32>
    %251 = arith.addf %250, %1 : vector<16x16xf32>
    %cst_101 = arith.constant dense<0xFF800000> : vector<16xf32>
    %252 = vector.multi_reduction <maximumf>, %251, %cst_101 [1] : vector<16x16xf32> to vector<16xf32>
    %253 = vector.shape_cast %252 : vector<16xf32> to vector<16x1xf32>
    %254 = vector.broadcast %253 : vector<16x1xf32> to vector<16x16xf32>
    %255 = arith.subf %251, %254 : vector<16x16xf32>
    %256 = math.exp %255 : vector<16x16xf32>
    %cst_102 = arith.constant dense<0.000000e+00> : vector<16xf32>
    %257 = vector.multi_reduction <add>, %256, %cst_102 [1] : vector<16x16xf32> to vector<16xf32>
    %258 = vector.shape_cast %257 : vector<16xf32> to vector<16x1xf32>
    %259 = tpu.reciprocal %258 : vector<16x1xf32> -> vector<16x1xf32>
    %260 = vector.broadcast %259 : vector<16x1xf32> to vector<16x16xf32>
    %261 = arith.mulf %256, %260 : vector<16x16xf32>
    %cst_103 = arith.constant dense<0.000000e+00> : vector<16x8xf32>
    %262 = tpu.matmul %261, %247, %cst_103 {dimension_numbers = #tpu.dot_dimension_numbers<[1], [0], [0], [1], [0, 0, 1, 1], [], []>} : vector<16x16xf32>, vector<16x8xf32>, vector<16x8xf32> -> vector<16x8xf32>
    %263 = vector.extract_strided_slice %184 {offsets = [16, 0], sizes = [8, 32], strides = [1, 1]} : vector<32x32xf32> to vector<8x32xf32>
    %cst_104 = arith.constant dense<0.000000e+00> : vector<16x32xf32>
    %264 = tpu.matmul %262, %263, %cst_104 {dimension_numbers = #tpu.dot_dimension_numbers<[1], [0], [0], [1], [0, 0, 1, 1], [], []>} : vector<16x8xf32>, vector<8x32xf32>, vector<16x32xf32> -> vector<16x32xf32>
    %265 = arith.addf %244, %264 : vector<16x32xf32>
    %266 = vector.extract_strided_slice %201 {offsets = [0, 24], sizes = [16, 8], strides = [1, 1]} : vector<16x96xf32> to vector<16x8xf32>
    %267 = vector.extract_strided_slice %201 {offsets = [0, 56], sizes = [16, 8], strides = [1, 1]} : vector<16x96xf32> to vector<16x8xf32>
    %268 = vector.extract_strided_slice %201 {offsets = [0, 88], sizes = [16, 8], strides = [1, 1]} : vector<16x96xf32> to vector<16x8xf32>
    %cst_105 = arith.constant dense<0.000000e+00> : vector<16x16xf32>
    %269 = tpu.matmul %266, %267, %cst_105 {dimension_numbers = #tpu.dot_dimension_numbers<[1], [1], [0], [0], [0, 0, 1, 0], [], []>} : vector<16x8xf32>, vector<16x8xf32>, vector<16x16xf32> -> vector<16x16xf32>
    %cst_106 = arith.constant 0.353553385 : f32
    %270 = vector.broadcast %cst_106 : f32 to vector<16x16xf32>
    %271 = arith.mulf %269, %270 : vector<16x16xf32>
    %272 = arith.addf %271, %1 : vector<16x16xf32>
    %cst_107 = arith.constant dense<0xFF800000> : vector<16xf32>
    %273 = vector.multi_reduction <maximumf>, %272, %cst_107 [1] : vector<16x16xf32> to vector<16xf32>
    %274 = vector.shape_cast %273 : vector<16xf32> to vector<16x1xf32>
    %275 = vector.broadcast %274 : vector<16x1xf32> to vector<16x16xf32>
    %276 = arith.subf %272, %275 : vector<16x16xf32>
    %277 = math.exp %276 : vector<16x16xf32>
    %cst_108 = arith.constant dense<0.000000e+00> : vector<16xf32>
    %278 = vector.multi_reduction <add>, %277, %cst_108 [1] : vector<16x16xf32> to vector<16xf32>
    %279 = vector.shape_cast %278 : vector<16xf32> to vector<16x1xf32>
    %280 = tpu.reciprocal %279 : vector<16x1xf32> -> vector<16x1xf32>
    %281 = vector.broadcast %280 : vector<16x1xf32> to vector<16x16xf32>
    %282 = arith.mulf %277, %281 : vector<16x16xf32>
    %cst_109 = arith.constant dense<0.000000e+00> : vector<16x8xf32>
    %283 = tpu.matmul %282, %268, %cst_109 {dimension_numbers = #tpu.dot_dimension_numbers<[1], [0], [0], [1], [0, 0, 1, 1], [], []>} : vector<16x16xf32>, vector<16x8xf32>, vector<16x8xf32> -> vector<16x8xf32>
    %284 = vector.extract_strided_slice %184 {offsets = [24, 0], sizes = [8, 32], strides = [1, 1]} : vector<32x32xf32> to vector<8x32xf32>
    %cst_110 = arith.constant dense<0.000000e+00> : vector<16x32xf32>
    %285 = tpu.matmul %283, %284, %cst_110 {dimension_numbers = #tpu.dot_dimension_numbers<[1], [0], [0], [1], [0, 0, 1, 1], [], []>} : vector<16x8xf32>, vector<8x32xf32>, vector<16x32xf32> -> vector<16x32xf32>
    %286 = arith.addf %265, %285 : vector<16x32xf32>
    %287 = vector.broadcast %193 : vector<1x32xf32> to vector<16x32xf32>
    %288 = arith.addf %286, %287 : vector<16x32xf32>
    %289 = arith.addf %178, %288 : vector<16x32xf32>
    %cst_111 = arith.constant dense<0.000000e+00> : vector<16xf32>
    %290 = vector.multi_reduction <add>, %289, %cst_111 [1] : vector<16x32xf32> to vector<16xf32>
    %291 = vector.shape_cast %290 : vector<16xf32> to vector<16x1xf32>
    %cst_112 = arith.constant 3.200000e+01 : f32
    %292 = vector.broadcast %cst_112 : f32 to vector<16x1xf32>
    %293 = arith.divf %291, %292 : vector<16x1xf32>
    %294 = vector.broadcast %293 : vector<16x1xf32> to vector<16x32xf32>
    %295 = arith.subf %289, %294 : vector<16x32xf32>
    %296 = arith.mulf %295, %295 : vector<16x32xf32>
    %cst_113 = arith.constant dense<0.000000e+00> : vector<16xf32>
    %297 = vector.multi_reduction <add>, %296, %cst_113 [1] : vector<16x32xf32> to vector<16xf32>
    %298 = vector.shape_cast %297 : vector<16xf32> to vector<16x1xf32>
    %cst_114 = arith.constant 3.100000e+01 : f32
    %299 = vector.broadcast %cst_114 : f32 to vector<16x1xf32>
    %300 = arith.divf %298, %299 : vector<16x1xf32>
    %301 = math.sqrt %300 : vector<16x1xf32>
    %cst_115 = arith.constant 9.99999997E-7 : f32
    %302 = vector.broadcast %cst_115 : f32 to vector<16x1xf32>
    %303 = arith.addf %301, %302 : vector<16x1xf32>
    %304 = tpu.reciprocal %303 : vector<16x1xf32> -> vector<16x1xf32>
    %305 = vector.broadcast %293 : vector<16x1xf32> to vector<16x32xf32>
    %306 = arith.subf %289, %305 : vector<16x32xf32>
    %307 = vector.broadcast %194 : vector<1x32xf32> to vector<16x32xf32>
    %308 = arith.mulf %307, %306 : vector<16x32xf32>
    %309 = vector.broadcast %304 : vector<16x1xf32> to vector<16x32xf32>
    %310 = arith.mulf %308, %309 : vector<16x32xf32>
    %311 = vector.broadcast %195 : vector<1x32xf32> to vector<16x32xf32>
    %312 = arith.addf %310, %311 : vector<16x32xf32>
    %cst_116 = arith.constant dense<0.000000e+00> : vector<16x64xf32>
    %313 = tpu.matmul %312, %186, %cst_116 {dimension_numbers = #tpu.dot_dimension_numbers<[1], [0], [0], [1], [0, 0, 1, 1], [], []>} : vector<16x32xf32>, vector<32x64xf32>, vector<16x64xf32> -> vector<16x64xf32>
    %314 = vector.broadcast %188 : vector<1x64xf32> to vector<16x64xf32>
    %315 = arith.addf %313, %314 : vector<16x64xf32>
    %316 = arith.mulf %315, %315 : vector<16x64xf32>
    %317 = arith.mulf %315, %316 : vector<16x64xf32>
    %cst_117 = arith.constant 4.471500e-02 : f32
    %318 = vector.broadcast %cst_117 : f32 to vector<16x64xf32>
    %319 = arith.mulf %318, %317 : vector<16x64xf32>
    %320 = arith.addf %315, %319 : vector<16x64xf32>
    %cst_118 = arith.constant 0.797884583 : f32
    %321 = vector.broadcast %cst_118 : f32 to vector<16x64xf32>
    %322 = arith.mulf %321, %320 : vector<16x64xf32>
    %323 = math.tanh %322 : vector<16x64xf32>
    %cst_119 = arith.constant 1.000000e+00 : f32
    %324 = vector.broadcast %cst_119 : f32 to vector<16x64xf32>
    %325 = arith.addf %324, %323 : vector<16x64xf32>
    %cst_120 = arith.constant 5.000000e-01 : f32
    %326 = vector.broadcast %cst_120 : f32 to vector<16x64xf32>
    %327 = arith.mulf %326, %325 : vector<16x64xf32>
    %328 = arith.mulf %315, %327 : vector<16x64xf32>
    %cst_121 = arith.constant dense<0.000000e+00> : vector<16x32xf32>
    %329 = tpu.matmul %328, %190, %cst_121 {dimension_numbers = #tpu.dot_dimension_numbers<[1], [0], [0], [1], [0, 0, 1, 1], [], []>} : vector<16x64xf32>, vector<64x32xf32>, vector<16x32xf32> -> vector<16x32xf32>
    %330 = vector.broadcast %196 : vector<1x32xf32> to vector<16x32xf32>
    %331 = arith.addf %329, %330 : vector<16x32xf32>
    %332 = arith.addf %312, %331 : vector<16x32xf32>
    %cst_122 = arith.constant dense<0.000000e+00> : vector<16xf32>
    %333 = vector.multi_reduction <add>, %332, %cst_122 [1] : vector<16x32xf32> to vector<16xf32>
    %334 = vector.shape_cast %333 : vector<16xf32> to vector<16x1xf32>
    %cst_123 = arith.constant 3.200000e+01 : f32
    %335 = vector.broadcast %cst_123 : f32 to vector<16x1xf32>
    %336 = arith.divf %334, %335 : vector<16x1xf32>
    %337 = vector.broadcast %336 : vector<16x1xf32> to vector<16x32xf32>
    %338 = arith.subf %332, %337 : vector<16x32xf32>
    %339 = arith.mulf %338, %338 : vector<16x32xf32>
    %cst_124 = arith.constant dense<0.000000e+00> : vector<16xf32>
    %340 = vector.multi_reduction <add>, %339, %cst_124 [1] : vector<16x32xf32> to vector<16xf32>
    %341 = vector.shape_cast %340 : vector<16xf32> to vector<16x1xf32>
    %cst_125 = arith.constant 3.100000e+01 : f32
    %342 = vector.broadcast %cst_125 : f32 to vector<16x1xf32>
    %343 = arith.divf %341, %342 : vector<16x1xf32>
    %344 = math.sqrt %343 : vector<16x1xf32>
    %cst_126 = arith.constant 9.99999997E-7 : f32
    %345 = vector.broadcast %cst_126 : f32 to vector<16x1xf32>
    %346 = arith.addf %344, %345 : vector<16x1xf32>
    %347 = tpu.reciprocal %346 : vector<16x1xf32> -> vector<16x1xf32>
    %348 = vector.broadcast %336 : vector<16x1xf32> to vector<16x32xf32>
    %349 = arith.subf %332, %348 : vector<16x32xf32>
    %350 = vector.broadcast %197 : vector<1x32xf32> to vector<16x32xf32>
    %351 = arith.mulf %350, %349 : vector<16x32xf32>
    %352 = vector.broadcast %347 : vector<16x1xf32> to vector<16x32xf32>
    %353 = arith.mulf %351, %352 : vector<16x32xf32>
    %354 = vector.broadcast %198 : vector<1x32xf32> to vector<16x32xf32>
    %355 = arith.addf %353, %354 : vector<16x32xf32>
    %c0_127 = arith.constant 0 : index
    %c0_128 = arith.constant 0 : index
    %356 = vector.load %arg10[%c0_127, %c0_128] : memref<16x32xf32, #tpu.memory_space<vmem>>, vector<16x32xf32>
    tpu.vector_store %arg10[%c0_127, %c0_128], %355 {strides = array<i32>} : memref<16x32xf32, #tpu.memory_space<vmem>>, vector<16x32xf32>,
    return
  }
  func.func @transform_0(%arg0: i32) -> (i32, i32) {
    %c0_i32 = arith.constant 0 : i32
    %c0_i32_0 = arith.constant 0 : i32
    %c0_i32_1 = arith.constant 0 : i32
    return %c0_i32, %c0_i32_0 : i32, i32
  }
  func.func @transform_1(%arg0: i32) -> (i32, i32) {
    %c0_i32 = arith.constant 0 : i32
    %c0_i32_0 = arith.constant 0 : i32
    %c0_i32_1 = arith.constant 0 : i32
    return %c0_i32, %c0_i32_0 : i32, i32
  }
  func.func @transform_2(%arg0: i32) -> (i32, i32, i32) {
    %c0_i32 = arith.constant 0 : i32
    %c0_i32_0 = arith.constant 0 : i32
    %c0_i32_1 = arith.constant 0 : i32
    %c0_i32_2 = arith.constant 0 : i32
    return %c0_i32, %c0_i32_0, %c0_i32_1 : i32, i32, i32
  }
  func.func @transform_3(%arg0: i32) -> (i32, i32, i32) {
    %c0_i32 = arith.constant 0 : i32
    %c0_i32_0 = arith.constant 0 : i32
    %c0_i32_1 = arith.constant 0 : i32
    %c0_i32_2 = arith.constant 0 : i32
    return %c0_i32, %c0_i32_0, %c0_i32_1 : i32, i32, i32
  }
  func.func @transform_4(%arg0: i32) -> (i32, i32, i32) {
    %c0_i32 = arith.constant 0 : i32
    %c0_i32_0 = arith.constant 0 : i32
    %c0_i32_1 = arith.constant 0 : i32
    %c0_i32_2 = arith.constant 0 : i32
    return %c0_i32, %c0_i32_0, %c0_i32_1 : i32, i32, i32
  }
  func.func @transform_5(%arg0: i32) -> (i32, i32, i32) {
    %c0_i32 = arith.constant 0 : i32
    %c0_i32_0 = arith.constant 0 : i32
    %c0_i32_1 = arith.constant 0 : i32
    %c0_i32_2 = arith.constant 0 : i32
    return %c0_i32, %c0_i32_0, %c0_i32_1 : i32, i32, i32
  }
  func.func @transform_6(%arg0: i32) -> (i32, i32, i32) {
    %c0_i32 = arith.constant 0 : i32
    %c0_i32_0 = arith.constant 0 : i32
    %c0_i32_1 = arith.constant 0 : i32
    %c0_i32_2 = arith.constant 0 : i32
    return %c0_i32, %c0_i32_0, %c0_i32_1 : i32, i32, i32
  }
  func.func @transform_7(%arg0: i32) -> (i32, i32, i32) {
    %c0_i32 = arith.constant 0 : i32
    %c0_i32_0 = arith.constant 0 : i32
    %c0_i32_1 = arith.constant 0 : i32
    %c0_i32_2 = arith.constant 0 : i32
    return %c0_i32, %c0_i32_0, %c0_i32_1 : i32, i32, i32
  }
  func.func @transform_8(%arg0: i32) -> (i32, i32, i32) {
    %c0_i32 = arith.constant 0 : i32
    %c0_i32_0 = arith.constant 0 : i32
    %c0_i32_1 = arith.constant 0 : i32
    %c0_i32_2 = arith.constant 0 : i32
    return %c0_i32, %c0_i32_0, %c0_i32_1 : i32, i32, i32
  }
  func.func @transform_9(%arg0: i32) -> (i32, i32) {
    %c0_i32 = arith.constant 0 : i32
    %c0_i32_0 = arith.constant 0 : i32
    %c0_i32_1 = arith.constant 0 : i32
    return %c0_i32, %c0_i32_0 : i32, i32
  }
}

</mosaic_0001>

<llo_original>
// kernel: tpu_custom_call.1
$region0: #{tpu_custom_call.1}
  #allocation0 [shape = 'u32[]', space=smem, size = 0x4, offset = 0x4, fixed_abs, tag = 'smem constant byte address 0x4 - core index']
  #allocation1 [shape = 'u32[72,128]{1,0:T(1,128)}', space=vmem, size = 0x9000, scoped, tag = 'internal scratch']
  %s0 = inlined_call_operand.vmem [shape: f32[16,32], index: 0, kind: input, shape index: {}]
  %s1 = inlined_call_operand.hbm [shape: f32[16,16], index: 1, kind: input, shape index: {}]
  %s2 = inlined_call_operand.vmem [shape: f32[2,32,96], index: 2, kind: input, shape index: {}]
  %s3 = inlined_call_operand.vmem [shape: f32[2,1,96], index: 3, kind: input, shape index: {}]
  %s4 = inlined_call_operand.vmem [shape: f32[2,32,32], index: 4, kind: input, shape index: {}]
  %s5 = inlined_call_operand.vmem [shape: f32[2,32,64], index: 5, kind: input, shape index: {}]
  %s6 = inlined_call_operand.vmem [shape: f32[2,1,64], index: 6, kind: input, shape index: {}]
  %s7 = inlined_call_operand.vmem [shape: f32[2,64,32], index: 7, kind: input, shape index: {}]
  %s8 = inlined_call_operand.vmem [shape: f32[2,6,32], index: 8, kind: input, shape index: {}]
  %s9 = inlined_call_operand.hbm [shape: f32[16,32], index: 9, kind: output, shape index: {}]
  %s10 = sld [smem:[#allocation0]]
  $region50: #{tpu_custom_call.1} parent=0
    _
  %s12 = ssub.s32 1, %s10
  %s13 = scalar_select 0, %s12, %s10
  $region1: #{tpu_custom_call.1} parent=0
    #allocation2 [shape = 'u8[8192]{0}', space=vmem, size = 0x2000, scoped, tag = 'input window, operand 1, single buffered']
    #allocation3 [shape = 's32[1]{0}', space=sflag, size = 0x4, scoped, tag = 'scoped memory for tpu_custom_call.1']
    #allocation4 [shape = 's32[1]{0}', space=sflag, size = 0x4, scoped, tag = 'scoped memory for tpu_custom_call.1']
    #allocation5 [shape = 'u8[8192]{0}', space=vmem, size = 0x2000, scoped, tag = 'output window, operand 0, single buffered']
    %14 = vsyncpa [#allocation3], 0
    %15 = vsyncpa [#allocation4], 0
    // Predicated region
    $region2: #{tpu_custom_call.1} parent=1 // pred_check
      _
    $region3: #{tpu_custom_call.1} parent=1 // pred_check_branch
      %17 = sbr.rel (0) target = $region5
    $region4: #{tpu_custom_call.1} parent=1 // pred_region
      _
    $region5: #{tpu_custom_call.1} parent=1 // pred_fallthru
      _
    // Predicated region
    $region6: #{tpu_custom_call.1} parent=1 // pred_check
      _
    $region7: #{tpu_custom_call.1} parent=1 // pred_check_branch
      %19 = sbr.rel (0) target = $region9
    $region8: #{tpu_custom_call.1} parent=1 // pred_region
      %21 = vsyncadd [#allocation3], 0
      %s22 = sshll.u32 %s1, 4
      %s23 = int_to_ptr.hbm [resolvable:$true] %s22
      %s24 = sshll.u32 [#allocation2], 4
      %s25 = int_to_ptr.vmem [resolvable:$true] %s24
      %30 = dma.hbm_to_vmem [thread:$0]  %s23, 256, %s25, [#allocation3], 128, 128, 8
    $region9: #{tpu_custom_call.1} parent=1 // pred_fallthru
      _
    // Predicated region
    $region10: #{tpu_custom_call.1} parent=1 // pred_check
      _
    $region11: #{tpu_custom_call.1} parent=1 // pred_check_branch
      %32 = sbr.rel (0) target = $region13
    $region12: #{tpu_custom_call.1} parent=1 // pred_region
      _
    $region13: #{tpu_custom_call.1} parent=1 // pred_fallthru
      _
    // Predicated region
    $region14: #{tpu_custom_call.1} parent=1 // pred_check
      _
    $region15: #{tpu_custom_call.1} parent=1 // pred_check_branch
      %34 = sbr.rel (0) target = $region17
    $region16: #{tpu_custom_call.1} parent=1 // pred_region
      _
    $region17: #{tpu_custom_call.1} parent=1 // pred_fallthru
      _
    // Predicated region
    $region18: #{tpu_custom_call.1} parent=1 // pred_check
      _
    $region19: #{tpu_custom_call.1} parent=1 // pred_check_branch
      %36 = sbr.rel (0) target = $region21
    $region20: #{tpu_custom_call.1} parent=1 // pred_region
      _
    $region21: #{tpu_custom_call.1} parent=1 // pred_fallthru
      _
    // Predicated region
    $region22: #{tpu_custom_call.1} parent=1 // pred_check
      _
    $region23: #{tpu_custom_call.1} parent=1 // pred_check_branch
      %38 = sbr.rel (0) target = $region25
    $region24: #{tpu_custom_call.1} parent=1 // pred_region
      _
    $region25: #{tpu_custom_call.1} parent=1 // pred_fallthru
      _
    // Predicated region
    $region26: #{tpu_custom_call.1} parent=1 // pred_check
      _
    $region27: #{tpu_custom_call.1} parent=1 // pred_check_branch
      %40 = sbr.rel (0) target = $region29
    $region28: #{tpu_custom_call.1} parent=1 // pred_region
      _
    $region29: #{tpu_custom_call.1} parent=1 // pred_fallthru
      _
    // Predicated region
    $region30: #{tpu_custom_call.1} parent=1 // pred_check
      _
    $region31: #{tpu_custom_call.1} parent=1 // pred_check_branch
      %42 = sbr.rel (0) target = $region33
    $region32: #{tpu_custom_call.1} parent=1 // pred_region
      _
    $region33: #{tpu_custom_call.1} parent=1 // pred_fallthru
      _
    // Predicated region
    $region34: #{tpu_custom_call.1} parent=1 // pred_check
      _
    $region35: #{tpu_custom_call.1} parent=1 // pred_check_branch
      %44 = sbr.rel (0) target = $region37
    $region36: #{tpu_custom_call.1} parent=1 // pred_region
      _
    $region37: #{tpu_custom_call.1} parent=1 // pred_fallthru
      _
    // Predicated region
    $region38: #{tpu_custom_call.1} parent=1 // pred_check
      _
    $region39: #{tpu_custom_call.1} parent=1 // pred_check_branch
      %46 = sbr.rel (0) target = $region41
    $region40: #{tpu_custom_call.1} parent=1 // pred_region
      %48 = dma.done [#allocation3], 256
    $region41: #{tpu_custom_call.1} parent=1 // pred_fallthru
      _
    %v49 = vld [vmem:[%s0] sm:$0xff]
    %v50 = vld [vmem:[%s0 + $0x8] sm:$0xff]
    %v51 = vld [vmem:[#allocation2] sm:$0xff]
    %v52 = vld [vmem:[#allocation2 + $0x8] sm:$0xff]
    %v53 = vld [vmem:[%s2] sm:$0xff]
    %v54 = vld [vmem:[%s2 + $0x8] sm:$0xff]
    %v55 = vld [vmem:[%s2 + $0x10] sm:$0xff]
    %v56 = vld [vmem:[%s2 + $0x18] sm:$0xff]
    %v57 = vld [vmem:[%s3] sm:$0x1]
    %v58 = vld [vmem:[%s4] sm:$0xff]
    %v59 = vld [vmem:[%s4 + $0x8] sm:$0xff]
    %v60 = vld [vmem:[%s4 + $0x10] sm:$0xff]
    %v61 = vld [vmem:[%s4 + $0x18] sm:$0xff]
    %v62 = vld [vmem:[%s5] sm:$0xff]
    %v63 = vld [vmem:[%s5 + $0x8] sm:$0xff]
    %v64 = vld [vmem:[%s5 + $0x10] sm:$0xff]
    %v65 = vld [vmem:[%s5 + $0x18] sm:$0xff]
    %v66 = vld [vmem:[%s6] sm:$0x1]
    %v67 = vld [vmem:[%s7] sm:$0xff]
    %v68 = vld [vmem:[%s7 + $0x8] sm:$0xff]
    %v69 = vld [vmem:[%s7 + $0x10] sm:$0xff]
    %v70 = vld [vmem:[%s7 + $0x18] sm:$0xff]
    %v71 = vld [vmem:[%s7 + $0x20] sm:$0xff]
    %v72 = vld [vmem:[%s7 + $0x28] sm:$0xff]
    %v73 = vld [vmem:[%s7 + $0x30] sm:$0xff]
    %v74 = vld [vmem:[%s7 + $0x38] sm:$0xff]
    %v75 = vld [vmem:[%s8] sm:$0x3f]
    %v77 = vperm.slane %v57, 0
    %vm79 = vcmask 261120
    %v81 = vsel %vm79, %v49, 0
    %v84 = vsel %vm79, %v50, 0
    %86 = vmatpush.msra.mxu0 0.0
    %87 = vmatpush.msra.mxu0 0.0
    %88 = vmatpush.msra.mxu0 0.0
    %89 = vmatpush.msra.mxu0 0.0
    %90 = vmatpush.msra.mxu0 0.0
    %91 = vmatpush.msra.mxu0 0.0
    %92 = vmatpush.msra.mxu0 0.0
    %93 = vmatpush.msra.mxu0 0.0
    %94 = vmatpush.msra.mxu0 0.0
    %95 = vmatpush.msra.mxu0 0.0
    %96 = vmatpush.msra.mxu0 0.0
    %97 = vmatpush.msra.mxu0 0.0
    %98 = vmatpush.msra.mxu0 %v56
    %99 = vmatpush.msra.mxu0 %v55
    %100 = vmatpush.msra.mxu0 %v54
    %101 = vmatpush.msra.mxu0 %v53
    %102 = vmatmul.f32.gmra.mxu0 %v81
    %v103 = vpop.f32.mrf.mxu0
    %v104 = vadd.f32 %v77, %v103
    %105 = vmatmul.f32.gmra.mxu0 %v84
    %v106 = vpop.f32.mrf.mxu0
    %v107 = vadd.f32 %v77, %v106
    %108 = vdwg.mxu0
    %111 = vrot.lane.b32.xlu0 %v104, 96
    %v112 = vpop.permute.xlu0 %111
    %113 = vrot.lane.b32.xlu0 %v107, 96
    %v114 = vpop.permute.xlu0 %113
    %vm115 = vcmask 64512
    %v116 = vsel %vm115, %v104, 0
    %v118 = vsel %vm115, %v107, 0
    %v120 = vsel %vm115, %v112, 0
    %v122 = vsel %vm115, %v114, 0
    %124 = vmatpush.xpose.msra.mxu0 0.0
    %125 = vmatpush.xpose.msra.mxu0 0.0
    %126 = vmatpush.xpose.msra.mxu0 0.0
    %127 = vmatpush.xpose.msra.mxu0 0.0
    %128 = vmatpush.xpose.msra.mxu0 0.0
    %129 = vmatpush.xpose.msra.mxu0 0.0
    %130 = vmatpush.xpose.msra.mxu0 0.0
    %131 = vmatpush.xpose.msra.mxu0 0.0
    %132 = vmatpush.xpose.msra.mxu0 0.0
    %133 = vmatpush.xpose.msra.mxu0 0.0
    %134 = vmatpush.xpose.msra.mxu0 0.0
    %135 = vmatpush.xpose.msra.mxu0 0.0
    %136 = vmatpush.xpose.msra.mxu0 0.0
    %137 = vmatpush.xpose.msra.mxu0 0.0
    %138 = vmatpush.xpose.msra.mxu0 %v122
    %139 = vmatpush.xpose.msra.mxu0 %v120
    %140 = vmatmul.f32.gmra.mxu0 %v116
    %v141 = vpop.f32.mrf.mxu0
    %v142 = vadd.f32 0.0, %v141
    %143 = vmatmul.f32.gmra.mxu0 %v118
    %v144 = vpop.f32.mrf.mxu0
    %v145 = vadd.f32 0.0, %v144
    %146 = vdwg.mxu0
    %v147 = vmul.f32 %v142, 0.35355338
    %v148 = vmul.f32 %v145, 0.35355338
    %v149 = vadd.f32 %v147, %v51
    %v150 = vadd.f32 %v148, %v52
    %vm151 = vcmask 130048
    %v152 = vsel %vm151, %v149, -inf
    %153 = vmax.xlane.f32.xlu0 %v152
    %v154 = vpop.xlane.xlu0 %153
    %v155 = vsel %vm151, %v150, -inf
    %156 = vmax.xlane.f32.xlu0 %v155
    %v157 = vpop.xlane.xlu0 %156
    %v158 = vsub.f32 %v149, %v154
    %v159 = vsub.f32 %v150, %v157
    %v160 = vmul.f32 %v158, 1.442695
    %v161 = vpow.pop %v160
    %v162 = vmul.f32 %v159, 1.442695
    %v163 = vpow.pop %v162
    %v164 = vsel %vm151, %v161, 0.0
    %165 = vadd.xlane.f32.xlu0 %v164
    %v166 = vpop.xlane.xlu0 %165
    %v167 = vsel %vm151, %v163, 0.0
    %168 = vadd.xlane.f32.xlu0 %v167
    %v169 = vpop.xlane.xlu0 %168
    %v170 = vrcp.pop %v166
    %v171 = vmul.f32 %v166, %v170
    %v172 = vsub.f32 1.0, %v171
    %v173 = vmul.f32 %v170, %v172
    %v174 = vadd.f32 %v170, %v173
    %vm175 = vweird.f32 %v166
    %vm176 = vweird.f32 %v170
    %vm177 = vmor %vm175, %vm176
    %v178 = vsel %vm177, %v170, %v174
    %v179 = vand.u32 2147483647, %v166
    %vm180 = vcmp.eq.f32.partialorder %v179, 8.507059e+37
    %v181 = vand.u32 %v166, 2147483648
    %v182 = vor.u32 1.1754944e-38, %v181
    %v183 = vsel %vm180, %v182, %v178
    %v184 = vrcp.pop %v169
    %v185 = vmul.f32 %v169, %v184
    %v186 = vsub.f32 1.0, %v185
    %v187 = vmul.f32 %v184, %v186
    %v188 = vadd.f32 %v184, %v187
    %vm189 = vweird.f32 %v169
    %vm190 = vweird.f32 %v184
    %vm191 = vmor %vm189, %vm190
    %v192 = vsel %vm191, %v184, %v188
    %v193 = vand.u32 2147483647, %v169
    %vm194 = vcmp.eq.f32.partialorder %v193, 8.507059e+37
    %v195 = vand.u32 %v169, 2147483648
    %v196 = vor.u32 1.1754944e-38, %v195
    %v197 = vsel %vm194, %v196, %v192
    %v198 = vmul.f32 %v161, %v183
    %v199 = vmul.f32 %v163, %v197
    %200 = vrot.lane.b32.xlu0 %v104, 64
    %v201 = vpop.permute.xlu0 %200
    %202 = vrot.lane.b32.xlu0 %v107, 64
    %v203 = vpop.permute.xlu0 %202
    %v207 = vsel %vm151, %v198, 0
    %v210 = vsel %vm151, %v199, 0
    %212 = vmatpush.msra.mxu0 0.0
    %213 = vmatpush.msra.mxu0 0.0
    %214 = vmatpush.msra.mxu0 0.0
    %215 = vmatpush.msra.mxu0 0.0
    %216 = vmatpush.msra.mxu0 0.0
    %217 = vmatpush.msra.mxu0 0.0
    %218 = vmatpush.msra.mxu0 0.0
    %219 = vmatpush.msra.mxu0 0.0
    %220 = vmatpush.msra.mxu0 0.0
    %221 = vmatpush.msra.mxu0 0.0
    %222 = vmatpush.msra.mxu0 0.0
    %223 = vmatpush.msra.mxu0 0.0
    %224 = vmatpush.msra.mxu0 0.0
    %225 = vmatpush.msra.mxu0 0.0
    %226 = vmatpush.msra.mxu0 %v203
    %227 = vmatpush.msra.mxu0 %v201
    %228 = vmatmul.f32.gmra.mxu0 %v207
    %v229 = vpop.f32.mrf.mxu0
    %v230 = vadd.f32 0.0, %v229
    %231 = vmatmul.f32.gmra.mxu0 %v210
    %v232 = vpop.f32.mrf.mxu0
    %v233 = vadd.f32 0.0, %v232
    %234 = vdwg.mxu0
    %235 = vrot.lane.b32.xlu0 %v104, 120
    %v236 = vpop.permute.xlu0 %235
    %237 = vrot.lane.b32.xlu0 %v107, 120
    %v238 = vpop.permute.xlu0 %237
    %239 = vrot.lane.b32.xlu0 %v104, 88
    %v240 = vpop.permute.xlu0 %239
    %241 = vrot.lane.b32.xlu0 %v107, 88
    %v242 = vpop.permute.xlu0 %241
    %v243 = vsel %vm115, %v236, 0
    %v245 = vsel %vm115, %v238, 0
    %v247 = vsel %vm115, %v240, 0
    %v249 = vsel %vm115, %v242, 0
    %251 = vmatpush.xpose.msra.mxu0 0.0
    %252 = vmatpush.xpose.msra.mxu0 0.0
    %253 = vmatpush.xpose.msra.mxu0 0.0
    %254 = vmatpush.xpose.msra.mxu0 0.0
    %255 = vmatpush.xpose.msra.mxu0 0.0
    %256 = vmatpush.xpose.msra.mxu0 0.0
    %257 = vmatpush.xpose.msra.mxu0 0.0
    %258 = vmatpush.xpose.msra.mxu0 0.0
    %259 = vmatpush.xpose.msra.mxu0 0.0
    %260 = vmatpush.xpose.msra.mxu0 0.0
    %261 = vmatpush.xpose.msra.mxu0 0.0
    %262 = vmatpush.xpose.msra.mxu0 0.0
    %263 = vmatpush.xpose.msra.mxu0 0.0
    %264 = vmatpush.xpose.msra.mxu0 0.0
    %265 = vmatpush.xpose.msra.mxu0 %v249
    %266 = vmatpush.xpose.msra.mxu0 %v247
    %267 = vmatmul.f32.gmra.mxu0 %v243
    %v268 = vpop.f32.mrf.mxu0
    %v269 = vadd.f32 0.0, %v268
    %270 = vmatmul.f32.gmra.mxu0 %v245
    %v271 = vpop.f32.mrf.mxu0
    %v272 = vadd.f32 0.0, %v271
    %273 = vdwg.mxu0
    %v274 = vmul.f32 %v269, 0.35355338
    %v275 = vmul.f32 %v272, 0.35355338
    %v276 = vadd.f32 %v274, %v51
    %v277 = vadd.f32 %v275, %v52
    %v278 = vsel %vm151, %v276, -inf
    %279 = vmax.xlane.f32.xlu0 %v278
    %v280 = vpop.xlane.xlu0 %279
    %v281 = vsel %vm151, %v277, -inf
    %282 = vmax.xlane.f32.xlu0 %v281
    %v283 = vpop.xlane.xlu0 %282
    %v284 = vsub.f32 %v276, %v280
    %v285 = vsub.f32 %v277, %v283
    %v286 = vmul.f32 %v284, 1.442695
    %v287 = vpow.pop %v286
    %v288 = vmul.f32 %v285, 1.442695
    %v289 = vpow.pop %v288
    %v290 = vsel %vm151, %v287, 0.0
    %291 = vadd.xlane.f32.xlu0 %v290
    %v292 = vpop.xlane.xlu0 %291
    %v293 = vsel %vm151, %v289, 0.0
    %294 = vadd.xlane.f32.xlu0 %v293
    %v295 = vpop.xlane.xlu0 %294
    %v296 = vrcp.pop %v292
    %v297 = vmul.f32 %v292, %v296
    %v298 = vsub.f32 1.0, %v297
    %v299 = vmul.f32 %v296, %v298
    %v300 = vadd.f32 %v296, %v299
    %vm301 = vweird.f32 %v292
    %vm302 = vweird.f32 %v296
    %vm303 = vmor %vm301, %vm302
    %v304 = vsel %vm303, %v296, %v300
    %v305 = vand.u32 2147483647, %v292
    %vm306 = vcmp.eq.f32.partialorder %v305, 8.507059e+37
    %v307 = vand.u32 %v292, 2147483648
    %v308 = vor.u32 1.1754944e-38, %v307
    %v309 = vsel %vm306, %v308, %v304
    %v310 = vrcp.pop %v295
    %v311 = vmul.f32 %v295, %v310
    %v312 = vsub.f32 1.0, %v311
    %v313 = vmul.f32 %v310, %v312
    %v314 = vadd.f32 %v310, %v313
    %vm315 = vweird.f32 %v295
    %vm316 = vweird.f32 %v310
    %vm317 = vmor %vm315, %vm316
    %v318 = vsel %vm317, %v310, %v314
    %v319 = vand.u32 2147483647, %v295
    %vm320 = vcmp.eq.f32.partialorder %v319, 8.507059e+37
    %v321 = vand.u32 %v295, 2147483648
    %v322 = vor.u32 1.1754944e-38, %v321
    %v323 = vsel %vm320, %v322, %v318
    %v324 = vmul.f32 %v287, %v309
    %v325 = vmul.f32 %v289, %v323
    %326 = vrot.lane.b32.xlu0 %v104, 56
    %v327 = vpop.permute.xlu0 %326
    %328 = vrot.lane.b32.xlu0 %v107, 56
    %v329 = vpop.permute.xlu0 %328
    %v333 = vsel %vm151, %v324, 0
    %v336 = vsel %vm151, %v325, 0
    %338 = vmatpush.msra.mxu0 0.0
    %339 = vmatpush.msra.mxu0 0.0
    %340 = vmatpush.msra.mxu0 0.0
    %341 = vmatpush.msra.mxu0 0.0
    %342 = vmatpush.msra.mxu0 0.0
    %343 = vmatpush.msra.mxu0 0.0
    %344 = vmatpush.msra.mxu0 0.0
    %345 = vmatpush.msra.mxu0 0.0
    %346 = vmatpush.msra.mxu0 0.0
    %347 = vmatpush.msra.mxu0 0.0
    %348 = vmatpush.msra.mxu0 0.0
    %349 = vmatpush.msra.mxu0 0.0
    %350 = vmatpush.msra.mxu0 0.0
    %351 = vmatpush.msra.mxu0 0.0
    %352 = vmatpush.msra.mxu0 %v329
    %353 = vmatpush.msra.mxu0 %v327
    %354 = vmatmul.f32.gmra.mxu0 %v333
    %v355 = vpop.f32.mrf.mxu0
    %v356 = vadd.f32 0.0, %v355
    %357 = vmatmul.f32.gmra.mxu0 %v336
    %v358 = vpop.f32.mrf.mxu0
    %v359 = vadd.f32 0.0, %v358
    %360 = vdwg.mxu0
    %v362 = vsel %vm115, %v356, 0
    %v365 = vsel %vm115, %v359, 0
    %367 = vmatpush.msra.mxu0 0.0
    %368 = vmatpush.msra.mxu0 0.0
    %369 = vmatpush.msra.mxu0 0.0
    %370 = vmatpush.msra.mxu0 0.0
    %371 = vmatpush.msra.mxu0 0.0
    %372 = vmatpush.msra.mxu0 0.0
    %373 = vmatpush.msra.mxu0 0.0
    %374 = vmatpush.msra.mxu0 0.0
    %375 = vmatpush.msra.mxu0 0.0
    %376 = vmatpush.msra.mxu0 0.0
    %377 = vmatpush.msra.mxu0 0.0
    %378 = vmatpush.msra.mxu0 0.0
    %379 = vmatpush.msra.mxu0 0.0
    %380 = vmatpush.msra.mxu0 0.0
    %381 = vmatpush.msra.mxu0 0.0
    %382 = vmatpush.msra.mxu0 %v59
    %383 = vmatmul.f32.gmra.mxu0 %v362
    %v384 = vpop.f32.mrf.mxu0
    %v385 = vadd.f32 0.0, %v384
    %386 = vmatmul.f32.gmra.mxu0 %v365
    %v387 = vpop.f32.mrf.mxu0
    %v388 = vadd.f32 0.0, %v387
    %389 = vdwg.mxu0
    %v391 = vsel %vm115, %v230, 0
    %v394 = vsel %vm115, %v233, 0
    %396 = vmatpush.msra.mxu0 0.0
    %397 = vmatpush.msra.mxu0 0.0
    %398 = vmatpush.msra.mxu0 0.0
    %399 = vmatpush.msra.mxu0 0.0
    %400 = vmatpush.msra.mxu0 0.0
    %401 = vmatpush.msra.mxu0 0.0
    %402 = vmatpush.msra.mxu0 0.0
    %403 = vmatpush.msra.mxu0 0.0
    %404 = vmatpush.msra.mxu0 0.0
    %405 = vmatpush.msra.mxu0 0.0
    %406 = vmatpush.msra.mxu0 0.0
    %407 = vmatpush.msra.mxu0 0.0
    %408 = vmatpush.msra.mxu0 0.0
    %409 = vmatpush.msra.mxu0 0.0
    %410 = vmatpush.msra.mxu0 0.0
    %411 = vmatpush.msra.mxu0 %v58
    %412 = vmatmul.f32.gmra.mxu0 %v391
    %v413 = vpop.f32.mrf.mxu0
    %v414 = vadd.f32 %v385, %v413
    %415 = vmatmul.f32.gmra.mxu0 %v394
    %v416 = vpop.f32.mrf.mxu0
    %v417 = vadd.f32 %v388, %v416
    %418 = vdwg.mxu0
    %419 = vrot.lane.b32.xlu0 %v104, 112
    %v420 = vpop.permute.xlu0 %419
    %421 = vrot.lane.b32.xlu0 %v107, 112
    %v422 = vpop.permute.xlu0 %421
    %423 = vrot.lane.b32.xlu0 %v104, 80
    %v424 = vpop.permute.xlu0 %423
    %425 = vrot.lane.b32.xlu0 %v107, 80
    %v426 = vpop.permute.xlu0 %425
    %v427 = vsel %vm115, %v420, 0
    %v429 = vsel %vm115, %v422, 0
    %v431 = vsel %vm115, %v424, 0
    %v433 = vsel %vm115, %v426, 0
    %435 = vmatpush.xpose.msra.mxu0 0.0
    %436 = vmatpush.xpose.msra.mxu0 0.0
    %437 = vmatpush.xpose.msra.mxu0 0.0
    %438 = vmatpush.xpose.msra.mxu0 0.0
    %439 = vmatpush.xpose.msra.mxu0 0.0
    %440 = vmatpush.xpose.msra.mxu0 0.0
    %441 = vmatpush.xpose.msra.mxu0 0.0
    %442 = vmatpush.xpose.msra.mxu0 0.0
    %443 = vmatpush.xpose.msra.mxu0 0.0
    %444 = vmatpush.xpose.msra.mxu0 0.0
    %445 = vmatpush.xpose.msra.mxu0 0.0
    %446 = vmatpush.xpose.msra.mxu0 0.0
    %447 = vmatpush.xpose.msra.mxu0 0.0
    %448 = vmatpush.xpose.msra.mxu0 0.0
    %449 = vmatpush.xpose.msra.mxu0 %v433
    %450 = vmatpush.xpose.msra.mxu0 %v431
    %451 = vmatmul.f32.gmra.mxu0 %v427
    %v452 = vpop.f32.mrf.mxu0
    %v453 = vadd.f32 0.0, %v452
    %454 = vmatmul.f32.gmra.mxu0 %v429
    %v455 = vpop.f32.mrf.mxu0
    %v456 = vadd.f32 0.0, %v455
    %457 = vdwg.mxu0
    %v458 = vmul.f32 %v453, 0.35355338
    %v459 = vmul.f32 %v456, 0.35355338
    %v460 = vadd.f32 %v458, %v51
    %v461 = vadd.f32 %v459, %v52
    %v462 = vsel %vm151, %v460, -inf
    %463 = vmax.xlane.f32.xlu0 %v462
    %v464 = vpop.xlane.xlu0 %463
    %v465 = vsel %vm151, %v461, -inf
    %466 = vmax.xlane.f32.xlu0 %v465
    %v467 = vpop.xlane.xlu0 %466
    %v468 = vsub.f32 %v460, %v464
    %v469 = vsub.f32 %v461, %v467
    %v470 = vmul.f32 %v468, 1.442695
    %v471 = vpow.pop %v470
    %v472 = vmul.f32 %v469, 1.442695
    %v473 = vpow.pop %v472
    %v474 = vsel %vm151, %v471, 0.0
    %475 = vadd.xlane.f32.xlu0 %v474
    %v476 = vpop.xlane.xlu0 %475
    %v477 = vsel %vm151, %v473, 0.0
    %478 = vadd.xlane.f32.xlu0 %v477
    %v479 = vpop.xlane.xlu0 %478
    %v480 = vrcp.pop %v476
    %v481 = vmul.f32 %v476, %v480
    %v482 = vsub.f32 1.0, %v481
    %v483 = vmul.f32 %v480, %v482
    %v484 = vadd.f32 %v480, %v483
    %vm485 = vweird.f32 %v476
    %vm486 = vweird.f32 %v480
    %vm487 = vmor %vm485, %vm486
    %v488 = vsel %vm487, %v480, %v484
    %v489 = vand.u32 2147483647, %v476
    %vm490 = vcmp.eq.f32.partialorder %v489, 8.507059e+37
    %v491 = vand.u32 %v476, 2147483648
    %v492 = vor.u32 1.1754944e-38, %v491
    %v493 = vsel %vm490, %v492, %v488
    %v494 = vrcp.pop %v479
    %v495 = vmul.f32 %v479, %v494
    %v496 = vsub.f32 1.0, %v495
    %v497 = vmul.f32 %v494, %v496
    %v498 = vadd.f32 %v494, %v497
    %vm499 = vweird.f32 %v479
    %vm500 = vweird.f32 %v494
    %vm501 = vmor %vm499, %vm500
    %v502 = vsel %vm501, %v494, %v498
    %v503 = vand.u32 2147483647, %v479
    %vm504 = vcmp.eq.f32.partialorder %v503, 8.507059e+37
    %v505 = vand.u32 %v479, 2147483648
    %v506 = vor.u32 1.1754944e-38, %v505
    %v507 = vsel %vm504, %v506, %v502
    %v508 = vmul.f32 %v471, %v493
    %v509 = vmul.f32 %v473, %v507
    %510 = vrot.lane.b32.xlu0 %v104, 48
    %v511 = vpop.permute.xlu0 %510
    %512 = vrot.lane.b32.xlu0 %v107, 48
    %v513 = vpop.permute.xlu0 %512
    %v517 = vsel %vm151, %v508, 0
    %v520 = vsel %vm151, %v509, 0
    %522 = vmatpush.msra.mxu0 0.0
    %523 = vmatpush.msra.mxu0 0.0
    %524 = vmatpush.msra.mxu0 0.0
    %525 = vmatpush.msra.mxu0 0.0
    %526 = vmatpush.msra.mxu0 0.0
    %527 = vmatpush.msra.mxu0 0.0
    %528 = vmatpush.msra.mxu0 0.0
    %529 = vmatpush.msra.mxu0 0.0
    %530 = vmatpush.msra.mxu0 0.0
    %531 = vmatpush.msra.mxu0 0.0
    %532 = vmatpush.msra.mxu0 0.0
    %533 = vmatpush.msra.mxu0 0.0
    %534 = vmatpush.msra.mxu0 0.0
    %535 = vmatpush.msra.mxu0 0.0
    %536 = vmatpush.msra.mxu0 %v513
    %537 = vmatpush.msra.mxu0 %v511
    %538 = vmatmul.f32.gmra.mxu0 %v517
    %v539 = vpop.f32.mrf.mxu0
    %v540 = vadd.f32 0.0, %v539
    %541 = vmatmul.f32.gmra.mxu0 %v520
    %v542 = vpop.f32.mrf.mxu0
    %v543 = vadd.f32 0.0, %v542
    %544 = vdwg.mxu0
    %v546 = vsel %vm115, %v540, 0
    %v549 = vsel %vm115, %v543, 0
    %551 = vmatpush.msra.mxu0 0.0
    %552 = vmatpush.msra.mxu0 0.0
    %553 = vmatpush.msra.mxu0 0.0
    %554 = vmatpush.msra.mxu0 0.0
    %555 = vmatpush.msra.mxu0 0.0
    %556 = vmatpush.msra.mxu0 0.0
    %557 = vmatpush.msra.mxu0 0.0
    %558 = vmatpush.msra.mxu0 0.0
    %559 = vmatpush.msra.mxu0 0.0
    %560 = vmatpush.msra.mxu0 0.0
    %561 = vmatpush.msra.mxu0 0.0
    %562 = vmatpush.msra.mxu0 0.0
    %563 = vmatpush.msra.mxu0 0.0
    %564 = vmatpush.msra.mxu0 0.0
    %565 = vmatpush.msra.mxu0 0.0
    %566 = vmatpush.msra.mxu0 %v60
    %567 = vmatmul.f32.gmra.mxu0 %v546
    %v568 = vpop.f32.mrf.mxu0
    %v569 = vadd.f32 0.0, %v568
    %570 = vmatmul.f32.gmra.mxu0 %v549
    %v571 = vpop.f32.mrf.mxu0
    %v572 = vadd.f32 0.0, %v571
    %573 = vdwg.mxu0
    %v574 = vadd.f32 %v414, %v569
    %v575 = vadd.f32 %v417, %v572
    %576 = vrot.lane.b32.xlu0 %v104, 104
    %v577 = vpop.permute.xlu0 %576
    %578 = vrot.lane.b32.xlu0 %v107, 104
    %v579 = vpop.permute.xlu0 %578
    %580 = vrot.lane.b32.xlu0 %v104, 72
    %v581 = vpop.permute.xlu0 %580
    %582 = vrot.lane.b32.xlu0 %v107, 72
    %v583 = vpop.permute.xlu0 %582
    %v584 = vsel %vm115, %v577, 0
    %v586 = vsel %vm115, %v579, 0
    %v588 = vsel %vm115, %v581, 0
    %v590 = vsel %vm115, %v583, 0
    %592 = vmatpush.xpose.msra.mxu0 0.0
    %593 = vmatpush.xpose.msra.mxu0 0.0
    %594 = vmatpush.xpose.msra.mxu0 0.0
    %595 = vmatpush.xpose.msra.mxu0 0.0
    %596 = vmatpush.xpose.msra.mxu0 0.0
    %597 = vmatpush.xpose.msra.mxu0 0.0
    %598 = vmatpush.xpose.msra.mxu0 0.0
    %599 = vmatpush.xpose.msra.mxu0 0.0
    %600 = vmatpush.xpose.msra.mxu0 0.0
    %601 = vmatpush.xpose.msra.mxu0 0.0
    %602 = vmatpush.xpose.msra.mxu0 0.0
    %603 = vmatpush.xpose.msra.mxu0 0.0
    %604 = vmatpush.xpose.msra.mxu0 0.0
    %605 = vmatpush.xpose.msra.mxu0 0.0
    %606 = vmatpush.xpose.msra.mxu0 %v590
    %607 = vmatpush.xpose.msra.mxu0 %v588
    %608 = vmatmul.f32.gmra.mxu0 %v584
    %v609 = vpop.f32.mrf.mxu0
    %v610 = vadd.f32 0.0, %v609
    %611 = vmatmul.f32.gmra.mxu0 %v586
    %v612 = vpop.f32.mrf.mxu0
    %v613 = vadd.f32 0.0, %v612
    %614 = vdwg.mxu0
    %v615 = vmul.f32 %v610, 0.35355338
    %v616 = vmul.f32 %v613, 0.35355338
    %v617 = vadd.f32 %v615, %v51
    %v618 = vadd.f32 %v616, %v52
    %v619 = vsel %vm151, %v617, -inf
    %620 = vmax.xlane.f32.xlu0 %v619
    %v621 = vpop.xlane.xlu0 %620
    %v622 = vsel %vm151, %v618, -inf
    %623 = vmax.xlane.f32.xlu0 %v622
    %v624 = vpop.xlane.xlu0 %623
    %v625 = vsub.f32 %v617, %v621
    %v626 = vsub.f32 %v618, %v624
    %v627 = vmul.f32 %v625, 1.442695
    %v628 = vpow.pop %v627
    %v629 = vmul.f32 %v626, 1.442695
    %v630 = vpow.pop %v629
    %v631 = vsel %vm151, %v628, 0.0
    %632 = vadd.xlane.f32.xlu0 %v631
    %v633 = vpop.xlane.xlu0 %632
    %v634 = vsel %vm151, %v630, 0.0
    %635 = vadd.xlane.f32.xlu0 %v634
    %v636 = vpop.xlane.xlu0 %635
    %v637 = vrcp.pop %v633
    %v638 = vmul.f32 %v633, %v637
    %v639 = vsub.f32 1.0, %v638
    %v640 = vmul.f32 %v637, %v639
    %v641 = vadd.f32 %v637, %v640
    %vm642 = vweird.f32 %v633
    %vm643 = vweird.f32 %v637
    %vm644 = vmor %vm642, %vm643
    %v645 = vsel %vm644, %v637, %v641
    %v646 = vand.u32 2147483647, %v633
    %vm647 = vcmp.eq.f32.partialorder %v646, 8.507059e+37
    %v648 = vand.u32 %v633, 2147483648
    %v649 = vor.u32 1.1754944e-38, %v648
    %v650 = vsel %vm647, %v649, %v645
    %v651 = vrcp.pop %v636
    %v652 = vmul.f32 %v636, %v651
    %v653 = vsub.f32 1.0, %v652
    %v654 = vmul.f32 %v651, %v653
    %v655 = vadd.f32 %v651, %v654
    %vm656 = vweird.f32 %v636
    %vm657 = vweird.f32 %v651
    %vm658 = vmor %vm656, %vm657
    %v659 = vsel %vm658, %v651, %v655
    %v660 = vand.u32 2147483647, %v636
    %vm661 = vcmp.eq.f32.partialorder %v660, 8.507059e+37
    %v662 = vand.u32 %v636, 2147483648
    %v663 = vor.u32 1.1754944e-38, %v662
    %v664 = vsel %vm661, %v663, %v659
    %v665 = vmul.f32 %v628, %v650
    %v666 = vmul.f32 %v630, %v664
    %667 = vrot.lane.b32.xlu0 %v104, 40
    %v668 = vpop.permute.xlu0 %667
    %669 = vrot.lane.b32.xlu0 %v107, 40
    %v670 = vpop.permute.xlu0 %669
    %v674 = vsel %vm151, %v665, 0
    %v677 = vsel %vm151, %v666, 0
    %679 = vmatpush.msra.mxu0 0.0
    %680 = vmatpush.msra.mxu0 0.0
    %681 = vmatpush.msra.mxu0 0.0
    %682 = vmatpush.msra.mxu0 0.0
    %683 = vmatpush.msra.mxu0 0.0
    %684 = vmatpush.msra.mxu0 0.0
    %685 = vmatpush.msra.mxu0 0.0
    %686 = vmatpush.msra.mxu0 0.0
    %687 = vmatpush.msra.mxu0 0.0
    %688 = vmatpush.msra.mxu0 0.0
    %689 = vmatpush.msra.mxu0 0.0
    %690 = vmatpush.msra.mxu0 0.0
    %691 = vmatpush.msra.mxu0 0.0
    %692 = vmatpush.msra.mxu0 0.0
    %693 = vmatpush.msra.mxu0 %v670
    %694 = vmatpush.msra.mxu0 %v668
    %695 = vmatmul.f32.gmra.mxu0 %v674
    %v696 = vpop.f32.mrf.mxu0
    %v697 = vadd.f32 0.0, %v696
    %698 = vmatmul.f32.gmra.mxu0 %v677
    %v699 = vpop.f32.mrf.mxu0
    %v700 = vadd.f32 0.0, %v699
    %701 = vdwg.mxu0
    %v703 = vsel %vm115, %v697, 0
    %v706 = vsel %vm115, %v700, 0
    %708 = vmatpush.msra.mxu0 0.0
    %709 = vmatpush.msra.mxu0 0.0
    %710 = vmatpush.msra.mxu0 0.0
    %711 = vmatpush.msra.mxu0 0.0
    %712 = vmatpush.msra.mxu0 0.0
    %713 = vmatpush.msra.mxu0 0.0
    %714 = vmatpush.msra.mxu0 0.0
    %715 = vmatpush.msra.mxu0 0.0
    %716 = vmatpush.msra.mxu0 0.0
    %717 = vmatpush.msra.mxu0 0.0
    %718 = vmatpush.msra.mxu0 0.0
    %719 = vmatpush.msra.mxu0 0.0
    %720 = vmatpush.msra.mxu0 0.0
    %721 = vmatpush.msra.mxu0 0.0
    %722 = vmatpush.msra.mxu0 0.0
    %723 = vmatpush.msra.mxu0 %v61
    %724 = vmatmul.f32.gmra.mxu0 %v703
    %v725 = vpop.f32.mrf.mxu0
    %v726 = vadd.f32 0.0, %v725
    %727 = vmatmul.f32.gmra.mxu0 %v706
    %v728 = vpop.f32.mrf.mxu0
    %v729 = vadd.f32 0.0, %v728
    %730 = vdwg.mxu0
    %v731 = vadd.f32 %v574, %v726
    %v732 = vadd.f32 %v575, %v729
    %v733 = vperm.slane %v75, 0
    %v734 = vadd.f32 %v731, %v733
    %v735 = vadd.f32 %v732, %v733
    %v736 = vadd.f32 %v49, %v734
    %v737 = vadd.f32 %v50, %v735
    %v738 = vsel %vm79, %v736, 0.0
    %739 = vadd.xlane.f32.xlu0 %v738
    %v740 = vpop.xlane.xlu0 %739
    %v741 = vsel %vm79, %v737, 0.0
    %742 = vadd.xlane.f32.xlu0 %v741
    %v743 = vpop.xlane.xlu0 %742
    %v744 = vrcp.pop 32.0
    %v745 = vmul.f32 32.0, %v744
    %v746 = vsub.f32 1.0, %v745
    %v747 = vmul.f32 %v744, %v746
    %v748 = vadd.f32 %v744, %v747
    %vm749 = vweird.f32 %v744
    %v750 = vsel %vm749, %v744, %v748
    %v751 = vmul.f32 %v740, %v750
    %v752 = vmul.f32 %v743, %v750
    %v753 = vsub.f32 %v736, %v751
    %v754 = vsub.f32 %v737, %v752
    %v755 = vmul.f32 %v753, %v753
    %v756 = vmul.f32 %v754, %v754
    %v757 = vsel %vm79, %v755, 0.0
    %758 = vadd.xlane.f32.xlu0 %v757
    %v759 = vpop.xlane.xlu0 %758
    %v760 = vsel %vm79, %v756, 0.0
    %761 = vadd.xlane.f32.xlu0 %v760
    %v762 = vpop.xlane.xlu0 %761
    %v763 = vrcp.pop 31.0
    %v764 = vmul.f32 31.0, %v763
    %v765 = vsub.f32 1.0, %v764
    %v766 = vmul.f32 %v763, %v765
    %v767 = vadd.f32 %v763, %v766
    %vm768 = vweird.f32 %v763
    %v769 = vsel %vm768, %v763, %v767
    %v770 = vmul.f32 %v759, %v769
    %v771 = vmul.f32 %v762, %v769
    %v772 = vrsqrt.pop %v770
    %v773 = vmul.f32 %v772, %v770
    %v774 = vmul.f32 %v773, %v772
    %v775 = vmul.f32 0.5, %v774
    %v776 = vsub.f32 1.5, %v775
    %v777 = vmul.f32 %v772, %v776
    %v778 = vmul.f32 %v770, %v777
    %vm779 = vcmp.eq.f32.partialorder %v770, inf
    %v780 = vsel %vm779, %v770, %v778
    %vm781 = vcmp.eq.f32.partialorder %v770, 0.0
    %v782 = vand.u32 %v770, 2147483648
    %v783 = vsel %vm781, %v782, %v780
    %v784 = vrsqrt.pop %v771
    %v785 = vmul.f32 %v784, %v771
    %v786 = vmul.f32 %v785, %v784
    %v787 = vmul.f32 0.5, %v786
    %v788 = vsub.f32 1.5, %v787
    %v789 = vmul.f32 %v784, %v788
    %v790 = vmul.f32 %v771, %v789
    %vm791 = vcmp.eq.f32.partialorder %v771, inf
    %v792 = vsel %vm791, %v771, %v790
    %vm793 = vcmp.eq.f32.partialorder %v771, 0.0
    %v794 = vand.u32 %v771, 2147483648
    %v795 = vsel %vm793, %v794, %v792
    %v796 = vadd.f32 %v783, 1e-06
    %v797 = vadd.f32 %v795, 1e-06
    %v798 = vrcp.pop %v796
    %v799 = vmul.f32 %v796, %v798
    %v800 = vsub.f32 1.0, %v799
    %v801 = vmul.f32 %v798, %v800
    %v802 = vadd.f32 %v798, %v801
    %vm803 = vweird.f32 %v796
    %vm804 = vweird.f32 %v798
    %vm805 = vmor %vm803, %vm804
    %v806 = vsel %vm805, %v798, %v802
    %v807 = vand.u32 2147483647, %v796
    %vm808 = vcmp.eq.f32.partialorder %v807, 8.507059e+37
    %v809 = vand.u32 %v796, 2147483648
    %v810 = vor.u32 1.1754944e-38, %v809
    %v811 = vsel %vm808, %v810, %v806
    %v812 = vrcp.pop %v797
    %v813 = vmul.f32 %v797, %v812
    %v814 = vsub.f32 1.0, %v813
    %v815 = vmul.f32 %v812, %v814
    %v816 = vadd.f32 %v812, %v815
    %vm817 = vweird.f32 %v797
    %vm818 = vweird.f32 %v812
    %vm819 = vmor %vm817, %vm818
    %v820 = vsel %vm819, %v812, %v816
    %v821 = vand.u32 2147483647, %v797
    %vm822 = vcmp.eq.f32.partialorder %v821, 8.507059e+37
    %v823 = vand.u32 %v797, 2147483648
    %v824 = vor.u32 1.1754944e-38, %v823
    %v825 = vsel %vm822, %v824, %v820
    %v826 = vperm.slane %v75, 1
    %v827 = vmul.f32 %v826, %v753
    %v828 = vmul.f32 %v826, %v754
    %v829 = vmul.f32 %v827, %v811
    %v830 = vmul.f32 %v828, %v825
    %v831 = vperm.slane %v75, 2
    %v832 = vadd.f32 %v829, %v831
    %v833 = vadd.f32 %v830, %v831
    %v835 = vperm.slane %v66, 0
    %v838 = vsel %vm79, %v832, 0
    %v841 = vsel %vm79, %v833, 0
    %843 = vmatpush.msra.mxu0 0.0
    %844 = vmatpush.msra.mxu0 0.0
    %845 = vmatpush.msra.mxu0 0.0
    %846 = vmatpush.msra.mxu0 0.0
    %847 = vmatpush.msra.mxu0 0.0
    %848 = vmatpush.msra.mxu0 0.0
    %849 = vmatpush.msra.mxu0 0.0
    %850 = vmatpush.msra.mxu0 0.0
    %851 = vmatpush.msra.mxu0 0.0
    %852 = vmatpush.msra.mxu0 0.0
    %853 = vmatpush.msra.mxu0 0.0
    %854 = vmatpush.msra.mxu0 0.0
    %855 = vmatpush.msra.mxu0 %v65
    %856 = vmatpush.msra.mxu0 %v64
    %857 = vmatpush.msra.mxu0 %v63
    %858 = vmatpush.msra.mxu0 %v62
    %859 = vmatmul.f32.gmra.mxu0 %v838
    %v860 = vpop.f32.mrf.mxu0
    %v861 = vadd.f32 %v835, %v860
    %862 = vmatmul.f32.gmra.mxu0 %v841
    %v863 = vpop.f32.mrf.mxu0
    %v864 = vadd.f32 %v835, %v863
    %865 = vdwg.mxu0
    %v866 = vmul.f32 %v861, %v861
    %v867 = vmul.f32 %v864, %v864
    %v868 = vmul.f32 %v861, %v866
    %v869 = vmul.f32 %v864, %v867
    %v870 = vmul.f32 %v868, 0.044715
    %v871 = vmul.f32 %v869, 0.044715
    %v872 = vadd.f32 %v861, %v870
    %v873 = vadd.f32 %v864, %v871
    %v874 = vmul.f32 %v872, 0.7978846
    %v875 = vmul.f32 %v873, 0.7978846
    %v876 = vtanh.pop %v874
    %v877 = vtanh.pop %v875
    %v878 = vadd.f32 %v876, 1.0
    %v879 = vadd.f32 %v877, 1.0
    %v880 = vmul.f32 %v878, 0.5
    %v881 = vmul.f32 %v879, 0.5
    %v882 = vmul.f32 %v861, %v880
    %v883 = vmul.f32 %v864, %v881
    %v884 = vperm.slane %v75, 3
    %vm885 = vcmask 523264
    %v887 = vsel %vm885, %v882, 0
    %v890 = vsel %vm885, %v883, 0
    %892 = vmatpush.msra.mxu0 0.0
    %893 = vmatpush.msra.mxu0 0.0
    %894 = vmatpush.msra.mxu0 0.0
    %895 = vmatpush.msra.mxu0 0.0
    %896 = vmatpush.msra.mxu0 0.0
    %897 = vmatpush.msra.mxu0 0.0
    %898 = vmatpush.msra.mxu0 0.0
    %899 = vmatpush.msra.mxu0 0.0
    %900 = vmatpush.msra.mxu0 %v74
    %901 = vmatpush.msra.mxu0 %v73
    %902 = vmatpush.msra.mxu0 %v72
    %903 = vmatpush.msra.mxu0 %v71
    %904 = vmatpush.msra.mxu0 %v70
    %905 = vmatpush.msra.mxu0 %v69
    %906 = vmatpush.msra.mxu0 %v68
    %907 = vmatpush.msra.mxu0 %v67
    %908 = vmatmul.f32.gmra.mxu0 %v887
    %v909 = vpop.f32.mrf.mxu0
    %v910 = vadd.f32 %v884, %v909
    %911 = vmatmul.f32.gmra.mxu0 %v890
    %v912 = vpop.f32.mrf.mxu0
    %v913 = vadd.f32 %v884, %v912
    %914 = vdwg.mxu0
    %v915 = vadd.f32 %v832, %v910
    %v916 = vadd.f32 %v833, %v913
    %v917 = vsel %vm79, %v915, 0.0
    %918 = vadd.xlane.f32.xlu0 %v917
    %v919 = vpop.xlane.xlu0 %918
    %v920 = vsel %vm79, %v916, 0.0
    %921 = vadd.xlane.f32.xlu0 %v920
    %v922 = vpop.xlane.xlu0 %921
    %v923 = vmul.f32 %v919, %v750
    %v924 = vmul.f32 %v922, %v750
    %v925 = vsub.f32 %v915, %v923
    %v926 = vsub.f32 %v916, %v924
    %v927 = vmul.f32 %v925, %v925
    %v928 = vmul.f32 %v926, %v926
    %v929 = vsel %vm79, %v927, 0.0
    %930 = vadd.xlane.f32.xlu0 %v929
    %v931 = vpop.xlane.xlu0 %930
    %v932 = vsel %vm79, %v928, 0.0
    %933 = vadd.xlane.f32.xlu0 %v932
    %v934 = vpop.xlane.xlu0 %933
    %v935 = vmul.f32 %v931, %v769
    %v936 = vmul.f32 %v934, %v769
    %v937 = vrsqrt.pop %v935
    %v938 = vmul.f32 %v937, %v935
    %v939 = vmul.f32 %v938, %v937
    %v940 = vmul.f32 0.5, %v939
    %v941 = vsub.f32 1.5, %v940
    %v942 = vmul.f32 %v937, %v941
    %v943 = vmul.f32 %v935, %v942
    %vm944 = vcmp.eq.f32.partialorder %v935, inf
    %v945 = vsel %vm944, %v935, %v943
    %vm946 = vcmp.eq.f32.partialorder %v935, 0.0
    %v947 = vand.u32 %v935, 2147483648
    %v948 = vsel %vm946, %v947, %v945
    %v949 = vrsqrt.pop %v936
    %v950 = vmul.f32 %v949, %v936
    %v951 = vmul.f32 %v950, %v949
    %v952 = vmul.f32 0.5, %v951
    %v953 = vsub.f32 1.5, %v952
    %v954 = vmul.f32 %v949, %v953
    %v955 = vmul.f32 %v936, %v954
    %vm956 = vcmp.eq.f32.partialorder %v936, inf
    %v957 = vsel %vm956, %v936, %v955
    %vm958 = vcmp.eq.f32.partialorder %v936, 0.0
    %v959 = vand.u32 %v936, 2147483648
    %v960 = vsel %vm958, %v959, %v957
    %v961 = vadd.f32 %v948, 1e-06
    %v962 = vadd.f32 %v960, 1e-06
    %v963 = vrcp.pop %v961
    %v964 = vmul.f32 %v961, %v963
    %v965 = vsub.f32 1.0, %v964
    %v966 = vmul.f32 %v963, %v965
    %v967 = vadd.f32 %v963, %v966
    %vm968 = vweird.f32 %v961
    %vm969 = vweird.f32 %v963
    %vm970 = vmor %vm968, %vm969
    %v971 = vsel %vm970, %v963, %v967
    %v972 = vand.u32 2147483647, %v961
    %vm973 = vcmp.eq.f32.partialorder %v972, 8.507059e+37
    %v974 = vand.u32 %v961, 2147483648
    %v975 = vor.u32 1.1754944e-38, %v974
    %v976 = vsel %vm973, %v975, %v971
    %v977 = vrcp.pop %v962
    %v978 = vmul.f32 %v962, %v977
    %v979 = vsub.f32 1.0, %v978
    %v980 = vmul.f32 %v977, %v979
    %v981 = vadd.f32 %v977, %v980
    %vm982 = vweird.f32 %v962
    %vm983 = vweird.f32 %v977
    %vm984 = vmor %vm982, %vm983
    %v985 = vsel %vm984, %v977, %v981
    %v986 = vand.u32 2147483647, %v962
    %vm987 = vcmp.eq.f32.partialorder %v986, 8.507059e+37
    %v988 = vand.u32 %v962, 2147483648
    %v989 = vor.u32 1.1754944e-38, %v988
    %v990 = vsel %vm987, %v989, %v985
    %v991 = vperm.slane %v75, 4
    %v992 = vmul.f32 %v991, %v925
    %v993 = vmul.f32 %v991, %v926
    %v994 = vmul.f32 %v992, %v976
    %v995 = vmul.f32 %v993, %v990
    %v996 = vperm.slane %v75, 5
    %v997 = vadd.f32 %v994, %v996
    %v998 = vadd.f32 %v995, %v996
    %s999 = scalar_lea.vmem %s2, 32
    %v1000 = vld [vmem:[%s999] sm:$0xff]
    %v1001 = vld [vmem:[%s999 + $0x8] sm:$0xff]
    %v1002 = vld [vmem:[%s999 + $0x10] sm:$0xff]
    %v1003 = vld [vmem:[%s999 + $0x18] sm:$0xff]
    %s1004 = scalar_lea.vmem %s3, 1
    %v1005 = vld [vmem:[%s1004] sm:$0x1]
    %s1006 = scalar_lea.vmem %s4, 32
    %v1007 = vld [vmem:[%s1006] sm:$0xff]
    %v1008 = vld [vmem:[%s1006 + $0x8] sm:$0xff]
    %v1009 = vld [vmem:[%s1006 + $0x10] sm:$0xff]
    %v1010 = vld [vmem:[%s1006 + $0x18] sm:$0xff]
    %s1011 = scalar_lea.vmem %s5, 32
    %v1012 = vld [vmem:[%s1011] sm:$0xff]
    %v1013 = vld [vmem:[%s1011 + $0x8] sm:$0xff]
    %v1014 = vld [vmem:[%s1011 + $0x10] sm:$0xff]
    %v1015 = vld [vmem:[%s1011 + $0x18] sm:$0xff]
    %s1016 = scalar_lea.vmem %s6, 1
    %v1017 = vld [vmem:[%s1016] sm:$0x1]
    %s1018 = scalar_lea.vmem %s7, 64
    %v1019 = vld [vmem:[%s1018] sm:$0xff]
    %v1020 = vld [vmem:[%s1018 + $0x8] sm:$0xff]
    %v1021 = vld [vmem:[%s1018 + $0x10] sm:$0xff]
    %v1022 = vld [vmem:[%s1018 + $0x18] sm:$0xff]
    %v1023 = vld [vmem:[%s1018 + $0x20] sm:$0xff]
    %v1024 = vld [vmem:[%s1018 + $0x28] sm:$0xff]
    %v1025 = vld [vmem:[%s1018 + $0x30] sm:$0xff]
    %v1026 = vld [vmem:[%s1018 + $0x38] sm:$0xff]
    %s1027 = scalar_lea.vmem %s8, 8
    %v1028 = vld [vmem:[%s1027] sm:$0x3f]
    %v1030 = vperm.slane %v1005, 0
    %v1033 = vsel %vm79, %v997, 0
    %v1036 = vsel %vm79, %v998, 0
    %1038 = vmatpush.msra.mxu0 0.0
    %1039 = vmatpush.msra.mxu0 0.0
    %1040 = vmatpush.msra.mxu0 0.0
    %1041 = vmatpush.msra.mxu0 0.0
    %1042 = vmatpush.msra.mxu0 0.0
    %1043 = vmatpush.msra.mxu0 0.0
    %1044 = vmatpush.msra.mxu0 0.0
    %1045 = vmatpush.msra.mxu0 0.0
    %1046 = vmatpush.msra.mxu0 0.0
    %1047 = vmatpush.msra.mxu0 0.0
    %1048 = vmatpush.msra.mxu0 0.0
    %1049 = vmatpush.msra.mxu0 0.0
    %1050 = vmatpush.msra.mxu0 %v1003
    %1051 = vmatpush.msra.mxu0 %v1002
    %1052 = vmatpush.msra.mxu0 %v1001
    %1053 = vmatpush.msra.mxu0 %v1000
    %1054 = vmatmul.f32.gmra.mxu0 %v1033
    %v1055 = vpop.f32.mrf.mxu0
    %v1056 = vadd.f32 %v1030, %v1055
    %1057 = vmatmul.f32.gmra.mxu0 %v1036
    %v1058 = vpop.f32.mrf.mxu0
    %v1059 = vadd.f32 %v1030, %v1058
    %1060 = vdwg.mxu0
    %1063 = vrot.lane.b32.xlu0 %v1056, 96
    %v1064 = vpop.permute.xlu0 %1063
    %1065 = vrot.lane.b32.xlu0 %v1059, 96
    %v1066 = vpop.permute.xlu0 %1065
    %v1067 = vsel %vm115, %v1056, 0
    %v1069 = vsel %vm115, %v1059, 0
    %v1071 = vsel %vm115, %v1064, 0
    %v1073 = vsel %vm115, %v1066, 0
    %1075 = vmatpush.xpose.msra.mxu0 0.0
    %1076 = vmatpush.xpose.msra.mxu0 0.0
    %1077 = vmatpush.xpose.msra.mxu0 0.0
    %1078 = vmatpush.xpose.msra.mxu0 0.0
    %1079 = vmatpush.xpose.msra.mxu0 0.0
    %1080 = vmatpush.xpose.msra.mxu0 0.0
    %1081 = vmatpush.xpose.msra.mxu0 0.0
    %1082 = vmatpush.xpose.msra.mxu0 0.0
    %1083 = vmatpush.xpose.msra.mxu0 0.0
    %1084 = vmatpush.xpose.msra.mxu0 0.0
    %1085 = vmatpush.xpose.msra.mxu0 0.0
    %1086 = vmatpush.xpose.msra.mxu0 0.0
    %1087 = vmatpush.xpose.msra.mxu0 0.0
    %1088 = vmatpush.xpose.msra.mxu0 0.0
    %1089 = vmatpush.xpose.msra.mxu0 %v1073
    %1090 = vmatpush.xpose.msra.mxu0 %v1071
    %1091 = vmatmul.f32.gmra.mxu0 %v1067
    %v1092 = vpop.f32.mrf.mxu0
    %v1093 = vadd.f32 0.0, %v1092
    %1094 = vmatmul.f32.gmra.mxu0 %v1069
    %v1095 = vpop.f32.mrf.mxu0
    %v1096 = vadd.f32 0.0, %v1095
    %1097 = vdwg.mxu0
    %v1098 = vmul.f32 %v1093, 0.35355338
    %v1099 = vmul.f32 %v1096, 0.35355338
    %v1100 = vadd.f32 %v1098, %v51
    %v1101 = vadd.f32 %v1099, %v52
    %v1102 = vsel %vm151, %v1100, -inf
    %1103 = vmax.xlane.f32.xlu0 %v1102
    %v1104 = vpop.xlane.xlu0 %1103
    %v1105 = vsel %vm151, %v1101, -inf
    %1106 = vmax.xlane.f32.xlu0 %v1105
    %v1107 = vpop.xlane.xlu0 %1106
    %v1108 = vsub.f32 %v1100, %v1104
    %v1109 = vsub.f32 %v1101, %v1107
    %v1110 = vmul.f32 %v1108, 1.442695
    %v1111 = vpow.pop %v1110
    %v1112 = vmul.f32 %v1109, 1.442695
    %v1113 = vpow.pop %v1112
    %v1114 = vsel %vm151, %v1111, 0.0
    %1115 = vadd.xlane.f32.xlu0 %v1114
    %v1116 = vpop.xlane.xlu0 %1115
    %v1117 = vsel %vm151, %v1113, 0.0
    %1118 = vadd.xlane.f32.xlu0 %v1117
    %v1119 = vpop.xlane.xlu0 %1118
    %v1120 = vrcp.pop %v1116
    %v1121 = vmul.f32 %v1116, %v1120
    %v1122 = vsub.f32 1.0, %v1121
    %v1123 = vmul.f32 %v1120, %v1122
    %v1124 = vadd.f32 %v1120, %v1123
    %vm1125 = vweird.f32 %v1116
    %vm1126 = vweird.f32 %v1120
    %vm1127 = vmor %vm1125, %vm1126
    %v1128 = vsel %vm1127, %v1120, %v1124
    %v1129 = vand.u32 2147483647, %v1116
    %vm1130 = vcmp.eq.f32.partialorder %v1129, 8.507059e+37
    %v1131 = vand.u32 %v1116, 2147483648
    %v1132 = vor.u32 1.1754944e-38, %v1131
    %v1133 = vsel %vm1130, %v1132, %v1128
    %v1134 = vrcp.pop %v1119
    %v1135 = vmul.f32 %v1119, %v1134
    %v1136 = vsub.f32 1.0, %v1135
    %v1137 = vmul.f32 %v1134, %v1136
    %v1138 = vadd.f32 %v1134, %v1137
    %vm1139 = vweird.f32 %v1119
    %vm1140 = vweird.f32 %v1134
    %vm1141 = vmor %vm1139, %vm1140
    %v1142 = vsel %vm1141, %v1134, %v1138
    %v1143 = vand.u32 2147483647, %v1119
    %vm1144 = vcmp.eq.f32.partialorder %v1143, 8.507059e+37
    %v1145 = vand.u32 %v1119, 2147483648
    %v1146 = vor.u32 1.1754944e-38, %v1145
    %v1147 = vsel %vm1144, %v1146, %v1142
    %v1148 = vmul.f32 %v1111, %v1133
    %v1149 = vmul.f32 %v1113, %v1147
    %1150 = vrot.lane.b32.xlu0 %v1056, 64
    %v1151 = vpop.permute.xlu0 %1150
    %1152 = vrot.lane.b32.xlu0 %v1059, 64
    %v1153 = vpop.permute.xlu0 %1152
    %v1157 = vsel %vm151, %v1148, 0
    %v1160 = vsel %vm151, %v1149, 0
    %1162 = vmatpush.msra.mxu0 0.0
    %1163 = vmatpush.msra.mxu0 0.0
    %1164 = vmatpush.msra.mxu0 0.0
    %1165 = vmatpush.msra.mxu0 0.0
    %1166 = vmatpush.msra.mxu0 0.0
    %1167 = vmatpush.msra.mxu0 0.0
    %1168 = vmatpush.msra.mxu0 0.0
    %1169 = vmatpush.msra.mxu0 0.0
    %1170 = vmatpush.msra.mxu0 0.0
    %1171 = vmatpush.msra.mxu0 0.0
    %1172 = vmatpush.msra.mxu0 0.0
    %1173 = vmatpush.msra.mxu0 0.0
    %1174 = vmatpush.msra.mxu0 0.0
    %1175 = vmatpush.msra.mxu0 0.0
    %1176 = vmatpush.msra.mxu0 %v1153
    %1177 = vmatpush.msra.mxu0 %v1151
    %1178 = vmatmul.f32.gmra.mxu0 %v1157
    %v1179 = vpop.f32.mrf.mxu0
    %v1180 = vadd.f32 0.0, %v1179
    %1181 = vmatmul.f32.gmra.mxu0 %v1160
    %v1182 = vpop.f32.mrf.mxu0
    %v1183 = vadd.f32 0.0, %v1182
    %1184 = vdwg.mxu0
    %1185 = vrot.lane.b32.xlu0 %v1056, 120
    %v1186 = vpop.permute.xlu0 %1185
    %1187 = vrot.lane.b32.xlu0 %v1059, 120
    %v1188 = vpop.permute.xlu0 %1187
    %1189 = vrot.lane.b32.xlu0 %v1056, 88
    %v1190 = vpop.permute.xlu0 %1189
    %1191 = vrot.lane.b32.xlu0 %v1059, 88
    %v1192 = vpop.permute.xlu0 %1191
    %v1193 = vsel %vm115, %v1186, 0
    %v1195 = vsel %vm115, %v1188, 0
    %v1197 = vsel %vm115, %v1190, 0
    %v1199 = vsel %vm115, %v1192, 0
    %1201 = vmatpush.xpose.msra.mxu0 0.0
    %1202 = vmatpush.xpose.msra.mxu0 0.0
    %1203 = vmatpush.xpose.msra.mxu0 0.0
    %1204 = vmatpush.xpose.msra.mxu0 0.0
    %1205 = vmatpush.xpose.msra.mxu0 0.0
    %1206 = vmatpush.xpose.msra.mxu0 0.0
    %1207 = vmatpush.xpose.msra.mxu0 0.0
    %1208 = vmatpush.xpose.msra.mxu0 0.0
    %1209 = vmatpush.xpose.msra.mxu0 0.0
    %1210 = vmatpush.xpose.msra.mxu0 0.0
    %1211 = vmatpush.xpose.msra.mxu0 0.0
    %1212 = vmatpush.xpose.msra.mxu0 0.0
    %1213 = vmatpush.xpose.msra.mxu0 0.0
    %1214 = vmatpush.xpose.msra.mxu0 0.0
    %1215 = vmatpush.xpose.msra.mxu0 %v1199
    %1216 = vmatpush.xpose.msra.mxu0 %v1197
    %1217 = vmatmul.f32.gmra.mxu0 %v1193
    %v1218 = vpop.f32.mrf.mxu0
    %v1219 = vadd.f32 0.0, %v1218
    %1220 = vmatmul.f32.gmra.mxu0 %v1195
    %v1221 = vpop.f32.mrf.mxu0
    %v1222 = vadd.f32 0.0, %v1221
    %1223 = vdwg.mxu0
    %v1224 = vmul.f32 %v1219, 0.35355338
    %v1225 = vmul.f32 %v1222, 0.35355338
    %v1226 = vadd.f32 %v1224, %v51
    %v1227 = vadd.f32 %v1225, %v52
    %v1228 = vsel %vm151, %v1226, -inf
    %1229 = vmax.xlane.f32.xlu0 %v1228
    %v1230 = vpop.xlane.xlu0 %1229
    %v1231 = vsel %vm151, %v1227, -inf
    %1232 = vmax.xlane.f32.xlu0 %v1231
    %v1233 = vpop.xlane.xlu0 %1232
    %v1234 = vsub.f32 %v1226, %v1230
    %v1235 = vsub.f32 %v1227, %v1233
    %v1236 = vmul.f32 %v1234, 1.442695
    %v1237 = vpow.pop %v1236
    %v1238 = vmul.f32 %v1235, 1.442695
    %v1239 = vpow.pop %v1238
    %v1240 = vsel %vm151, %v1237, 0.0
    %1241 = vadd.xlane.f32.xlu0 %v1240
    %v1242 = vpop.xlane.xlu0 %1241
    %v1243 = vsel %vm151, %v1239, 0.0
    %1244 = vadd.xlane.f32.xlu0 %v1243
    %v1245 = vpop.xlane.xlu0 %1244
    %v1246 = vrcp.pop %v1242
    %v1247 = vmul.f32 %v1242, %v1246
    %v1248 = vsub.f32 1.0, %v1247
    %v1249 = vmul.f32 %v1246, %v1248
    %v1250 = vadd.f32 %v1246, %v1249
    %vm1251 = vweird.f32 %v1242
    %vm1252 = vweird.f32 %v1246
    %vm1253 = vmor %vm1251, %vm1252
    %v1254 = vsel %vm1253, %v1246, %v1250
    %v1255 = vand.u32 2147483647, %v1242
    %vm1256 = vcmp.eq.f32.partialorder %v1255, 8.507059e+37
    %v1257 = vand.u32 %v1242, 2147483648
    %v1258 = vor.u32 1.1754944e-38, %v1257
    %v1259 = vsel %vm1256, %v1258, %v1254
    %v1260 = vrcp.pop %v1245
    %v1261 = vmul.f32 %v1245, %v1260
    %v1262 = vsub.f32 1.0, %v1261
    %v1263 = vmul.f32 %v1260, %v1262
    %v1264 = vadd.f32 %v1260, %v1263
    %vm1265 = vweird.f32 %v1245
    %vm1266 = vweird.f32 %v1260
    %vm1267 = vmor %vm1265, %vm1266
    %v1268 = vsel %vm1267, %v1260, %v1264
    %v1269 = vand.u32 2147483647, %v1245
    %vm1270 = vcmp.eq.f32.partialorder %v1269, 8.507059e+37
    %v1271 = vand.u32 %v1245, 2147483648
    %v1272 = vor.u32 1.1754944e-38, %v1271
    %v1273 = vsel %vm1270, %v1272, %v1268
    %v1274 = vmul.f32 %v1237, %v1259
    %v1275 = vmul.f32 %v1239, %v1273
    %1276 = vrot.lane.b32.xlu0 %v1056, 56
    %v1277 = vpop.permute.xlu0 %1276
    %1278 = vrot.lane.b32.xlu0 %v1059, 56
    %v1279 = vpop.permute.xlu0 %1278
    %v1283 = vsel %vm151, %v1274, 0
    %v1286 = vsel %vm151, %v1275, 0
    %1288 = vmatpush.msra.mxu0 0.0
    %1289 = vmatpush.msra.mxu0 0.0
    %1290 = vmatpush.msra.mxu0 0.0
    %1291 = vmatpush.msra.mxu0 0.0
    %1292 = vmatpush.msra.mxu0 0.0
    %1293 = vmatpush.msra.mxu0 0.0
    %1294 = vmatpush.msra.mxu0 0.0
    %1295 = vmatpush.msra.mxu0 0.0
    %1296 = vmatpush.msra.mxu0 0.0
    %1297 = vmatpush.msra.mxu0 0.0
    %1298 = vmatpush.msra.mxu0 0.0
    %1299 = vmatpush.msra.mxu0 0.0
    %1300 = vmatpush.msra.mxu0 0.0
    %1301 = vmatpush.msra.mxu0 0.0
    %1302 = vmatpush.msra.mxu0 %v1279
    %1303 = vmatpush.msra.mxu0 %v1277
    %1304 = vmatmul.f32.gmra.mxu0 %v1283
    %v1305 = vpop.f32.mrf.mxu0
    %v1306 = vadd.f32 0.0, %v1305
    %1307 = vmatmul.f32.gmra.mxu0 %v1286
    %v1308 = vpop.f32.mrf.mxu0
    %v1309 = vadd.f32 0.0, %v1308
    %1310 = vdwg.mxu0
    %v1312 = vsel %vm115, %v1306, 0
    %v1315 = vsel %vm115, %v1309, 0
    %1317 = vmatpush.msra.mxu0 0.0
    %1318 = vmatpush.msra.mxu0 0.0
    %1319 = vmatpush.msra.mxu0 0.0
    %1320 = vmatpush.msra.mxu0 0.0
    %1321 = vmatpush.msra.mxu0 0.0
    %1322 = vmatpush.msra.mxu0 0.0
    %1323 = vmatpush.msra.mxu0 0.0
    %1324 = vmatpush.msra.mxu0 0.0
    %1325 = vmatpush.msra.mxu0 0.0
    %1326 = vmatpush.msra.mxu0 0.0
    %1327 = vmatpush.msra.mxu0 0.0
    %1328 = vmatpush.msra.mxu0 0.0
    %1329 = vmatpush.msra.mxu0 0.0
    %1330 = vmatpush.msra.mxu0 0.0
    %1331 = vmatpush.msra.mxu0 0.0
    %1332 = vmatpush.msra.mxu0 %v1008
    %1333 = vmatmul.f32.gmra.mxu0 %v1312
    %v1334 = vpop.f32.mrf.mxu0
    %v1335 = vadd.f32 0.0, %v1334
    %1336 = vmatmul.f32.gmra.mxu0 %v1315
    %v1337 = vpop.f32.mrf.mxu0
    %v1338 = vadd.f32 0.0, %v1337
    %1339 = vdwg.mxu0
    %v1341 = vsel %vm115, %v1180, 0
    %v1344 = vsel %vm115, %v1183, 0
    %1346 = vmatpush.msra.mxu0 0.0
    %1347 = vmatpush.msra.mxu0 0.0
    %1348 = vmatpush.msra.mxu0 0.0
    %1349 = vmatpush.msra.mxu0 0.0
    %1350 = vmatpush.msra.mxu0 0.0
    %1351 = vmatpush.msra.mxu0 0.0
    %1352 = vmatpush.msra.mxu0 0.0
    %1353 = vmatpush.msra.mxu0 0.0
    %1354 = vmatpush.msra.mxu0 0.0
    %1355 = vmatpush.msra.mxu0 0.0
    %1356 = vmatpush.msra.mxu0 0.0
    %1357 = vmatpush.msra.mxu0 0.0
    %1358 = vmatpush.msra.mxu0 0.0
    %1359 = vmatpush.msra.mxu0 0.0
    %1360 = vmatpush.msra.mxu0 0.0
    %1361 = vmatpush.msra.mxu0 %v1007
    %1362 = vmatmul.f32.gmra.mxu0 %v1341
    %v1363 = vpop.f32.mrf.mxu0
    %v1364 = vadd.f32 %v1335, %v1363
    %1365 = vmatmul.f32.gmra.mxu0 %v1344
    %v1366 = vpop.f32.mrf.mxu0
    %v1367 = vadd.f32 %v1338, %v1366
    %1368 = vdwg.mxu0
    %1369 = vrot.lane.b32.xlu0 %v1056, 112
    %v1370 = vpop.permute.xlu0 %1369
    %1371 = vrot.lane.b32.xlu0 %v1059, 112
    %v1372 = vpop.permute.xlu0 %1371
    %1373 = vrot.lane.b32.xlu0 %v1056, 80
    %v1374 = vpop.permute.xlu0 %1373
    %1375 = vrot.lane.b32.xlu0 %v1059, 80
    %v1376 = vpop.permute.xlu0 %1375
    %v1377 = vsel %vm115, %v1370, 0
    %v1379 = vsel %vm115, %v1372, 0
    %v1381 = vsel %vm115, %v1374, 0
    %v1383 = vsel %vm115, %v1376, 0
    %1385 = vmatpush.xpose.msra.mxu0 0.0
    %1386 = vmatpush.xpose.msra.mxu0 0.0
    %1387 = vmatpush.xpose.msra.mxu0 0.0
    %1388 = vmatpush.xpose.msra.mxu0 0.0
    %1389 = vmatpush.xpose.msra.mxu0 0.0
    %1390 = vmatpush.xpose.msra.mxu0 0.0
    %1391 = vmatpush.xpose.msra.mxu0 0.0
    %1392 = vmatpush.xpose.msra.mxu0 0.0
    %1393 = vmatpush.xpose.msra.mxu0 0.0
    %1394 = vmatpush.xpose.msra.mxu0 0.0
    %1395 = vmatpush.xpose.msra.mxu0 0.0
    %1396 = vmatpush.xpose.msra.mxu0 0.0
    %1397 = vmatpush.xpose.msra.mxu0 0.0
    %1398 = vmatpush.xpose.msra.mxu0 0.0
    %1399 = vmatpush.xpose.msra.mxu0 %v1383
    %1400 = vmatpush.xpose.msra.mxu0 %v1381
    %1401 = vmatmul.f32.gmra.mxu0 %v1377
    %v1402 = vpop.f32.mrf.mxu0
    %v1403 = vadd.f32 0.0, %v1402
    %1404 = vmatmul.f32.gmra.mxu0 %v1379
    %v1405 = vpop.f32.mrf.mxu0
    %v1406 = vadd.f32 0.0, %v1405
    %1407 = vdwg.mxu0
    %v1408 = vmul.f32 %v1403, 0.35355338
    %v1409 = vmul.f32 %v1406, 0.35355338
    %v1410 = vadd.f32 %v1408, %v51
    %v1411 = vadd.f32 %v1409, %v52
    %v1412 = vsel %vm151, %v1410, -inf
    %1413 = vmax.xlane.f32.xlu0 %v1412
    %v1414 = vpop.xlane.xlu0 %1413
    %v1415 = vsel %vm151, %v1411, -inf
    %1416 = vmax.xlane.f32.xlu0 %v1415
    %v1417 = vpop.xlane.xlu0 %1416
    %v1418 = vsub.f32 %v1410, %v1414
    %v1419 = vsub.f32 %v1411, %v1417
    %v1420 = vmul.f32 %v1418, 1.442695
    %v1421 = vpow.pop %v1420
    %v1422 = vmul.f32 %v1419, 1.442695
    %v1423 = vpow.pop %v1422
    %v1424 = vsel %vm151, %v1421, 0.0
    %1425 = vadd.xlane.f32.xlu0 %v1424
    %v1426 = vpop.xlane.xlu0 %1425
    %v1427 = vsel %vm151, %v1423, 0.0
    %1428 = vadd.xlane.f32.xlu0 %v1427
    %v1429 = vpop.xlane.xlu0 %1428
    %v1430 = vrcp.pop %v1426
    %v1431 = vmul.f32 %v1426, %v1430
    %v1432 = vsub.f32 1.0, %v1431
    %v1433 = vmul.f32 %v1430, %v1432
    %v1434 = vadd.f32 %v1430, %v1433
    %vm1435 = vweird.f32 %v1426
    %vm1436 = vweird.f32 %v1430
    %vm1437 = vmor %vm1435, %vm1436
    %v1438 = vsel %vm1437, %v1430, %v1434
    %v1439 = vand.u32 2147483647, %v1426
    %vm1440 = vcmp.eq.f32.partialorder %v1439, 8.507059e+37
    %v1441 = vand.u32 %v1426, 2147483648
    %v1442 = vor.u32 1.1754944e-38, %v1441
    %v1443 = vsel %vm1440, %v1442, %v1438
    %v1444 = vrcp.pop %v1429
    %v1445 = vmul.f32 %v1429, %v1444
    %v1446 = vsub.f32 1.0, %v1445
    %v1447 = vmul.f32 %v1444, %v1446
    %v1448 = vadd.f32 %v1444, %v1447
    %vm1449 = vweird.f32 %v1429
    %vm1450 = vweird.f32 %v1444
    %vm1451 = vmor %vm1449, %vm1450
    %v1452 = vsel %vm1451, %v1444, %v1448
    %v1453 = vand.u32 2147483647, %v1429
    %vm1454 = vcmp.eq.f32.partialorder %v1453, 8.507059e+37
    %v1455 = vand.u32 %v1429, 2147483648
    %v1456 = vor.u32 1.1754944e-38, %v1455
    %v1457 = vsel %vm1454, %v1456, %v1452
    %v1458 = vmul.f32 %v1421, %v1443
    %v1459 = vmul.f32 %v1423, %v1457
    %1460 = vrot.lane.b32.xlu0 %v1056, 48
    %v1461 = vpop.permute.xlu0 %1460
    %1462 = vrot.lane.b32.xlu0 %v1059, 48
    %v1463 = vpop.permute.xlu0 %1462
    %v1467 = vsel %vm151, %v1458, 0
    %v1470 = vsel %vm151, %v1459, 0
    %1472 = vmatpush.msra.mxu0 0.0
    %1473 = vmatpush.msra.mxu0 0.0
    %1474 = vmatpush.msra.mxu0 0.0
    %1475 = vmatpush.msra.mxu0 0.0
    %1476 = vmatpush.msra.mxu0 0.0
    %1477 = vmatpush.msra.mxu0 0.0
    %1478 = vmatpush.msra.mxu0 0.0
    %1479 = vmatpush.msra.mxu0 0.0
    %1480 = vmatpush.msra.mxu0 0.0
    %1481 = vmatpush.msra.mxu0 0.0
    %1482 = vmatpush.msra.mxu0 0.0
    %1483 = vmatpush.msra.mxu0 0.0
    %1484 = vmatpush.msra.mxu0 0.0
    %1485 = vmatpush.msra.mxu0 0.0
    %1486 = vmatpush.msra.mxu0 %v1463
    %1487 = vmatpush.msra.mxu0 %v1461
    %1488 = vmatmul.f32.gmra.mxu0 %v1467
    %v1489 = vpop.f32.mrf.mxu0
    %v1490 = vadd.f32 0.0, %v1489
    %1491 = vmatmul.f32.gmra.mxu0 %v1470
    %v1492 = vpop.f32.mrf.mxu0
    %v1493 = vadd.f32 0.0, %v1492
    %1494 = vdwg.mxu0
    %v1496 = vsel %vm115, %v1490, 0
    %v1499 = vsel %vm115, %v1493, 0
    %1501 = vmatpush.msra.mxu0 0.0
    %1502 = vmatpush.msra.mxu0 0.0
    %1503 = vmatpush.msra.mxu0 0.0
    %1504 = vmatpush.msra.mxu0 0.0
    %1505 = vmatpush.msra.mxu0 0.0
    %1506 = vmatpush.msra.mxu0 0.0
    %1507 = vmatpush.msra.mxu0 0.0
    %1508 = vmatpush.msra.mxu0 0.0
    %1509 = vmatpush.msra.mxu0 0.0
    %1510 = vmatpush.msra.mxu0 0.0
    %1511 = vmatpush.msra.mxu0 0.0
    %1512 = vmatpush.msra.mxu0 0.0
    %1513 = vmatpush.msra.mxu0 0.0
    %1514 = vmatpush.msra.mxu0 0.0
    %1515 = vmatpush.msra.mxu0 0.0
    %1516 = vmatpush.msra.mxu0 %v1009
    %1517 = vmatmul.f32.gmra.mxu0 %v1496
    %v1518 = vpop.f32.mrf.mxu0
    %v1519 = vadd.f32 0.0, %v1518
    %1520 = vmatmul.f32.gmra.mxu0 %v1499
    %v1521 = vpop.f32.mrf.mxu0
    %v1522 = vadd.f32 0.0, %v1521
    %1523 = vdwg.mxu0
    %v1524 = vadd.f32 %v1364, %v1519
    %v1525 = vadd.f32 %v1367, %v1522
    %1526 = vrot.lane.b32.xlu0 %v1056, 104
    %v1527 = vpop.permute.xlu0 %1526
    %1528 = vrot.lane.b32.xlu0 %v1059, 104
    %v1529 = vpop.permute.xlu0 %1528
    %1530 = vrot.lane.b32.xlu0 %v1056, 72
    %v1531 = vpop.permute.xlu0 %1530
    %1532 = vrot.lane.b32.xlu0 %v1059, 72
    %v1533 = vpop.permute.xlu0 %1532
    %v1534 = vsel %vm115, %v1527, 0
    %v1536 = vsel %vm115, %v1529, 0
    %v1538 = vsel %vm115, %v1531, 0
    %v1540 = vsel %vm115, %v1533, 0
    %1542 = vmatpush.xpose.msra.mxu0 0.0
    %1543 = vmatpush.xpose.msra.mxu0 0.0
    %1544 = vmatpush.xpose.msra.mxu0 0.0
    %1545 = vmatpush.xpose.msra.mxu0 0.0
    %1546 = vmatpush.xpose.msra.mxu0 0.0
    %1547 = vmatpush.xpose.msra.mxu0 0.0
    %1548 = vmatpush.xpose.msra.mxu0 0.0
    %1549 = vmatpush.xpose.msra.mxu0 0.0
    %1550 = vmatpush.xpose.msra.mxu0 0.0
    %1551 = vmatpush.xpose.msra.mxu0 0.0
    %1552 = vmatpush.xpose.msra.mxu0 0.0
    %1553 = vmatpush.xpose.msra.mxu0 0.0
    %1554 = vmatpush.xpose.msra.mxu0 0.0
    %1555 = vmatpush.xpose.msra.mxu0 0.0
    %1556 = vmatpush.xpose.msra.mxu0 %v1540
    %1557 = vmatpush.xpose.msra.mxu0 %v1538
    %1558 = vmatmul.f32.gmra.mxu0 %v1534
    %v1559 = vpop.f32.mrf.mxu0
    %v1560 = vadd.f32 0.0, %v1559
    %1561 = vmatmul.f32.gmra.mxu0 %v1536
    %v1562 = vpop.f32.mrf.mxu0
    %v1563 = vadd.f32 0.0, %v1562
    %1564 = vdwg.mxu0
    %v1565 = vmul.f32 %v1560, 0.35355338
    %v1566 = vmul.f32 %v1563, 0.35355338
    %v1567 = vadd.f32 %v1565, %v51
    %v1568 = vadd.f32 %v1566, %v52
    %v1569 = vsel %vm151, %v1567, -inf
    %1570 = vmax.xlane.f32.xlu0 %v1569
    %v1571 = vpop.xlane.xlu0 %1570
    %v1572 = vsel %vm151, %v1568, -inf
    %1573 = vmax.xlane.f32.xlu0 %v1572
    %v1574 = vpop.xlane.xlu0 %1573
    %v1575 = vsub.f32 %v1567, %v1571
    %v1576 = vsub.f32 %v1568, %v1574
    %v1577 = vmul.f32 %v1575, 1.442695
    %v1578 = vpow.pop %v1577
    %v1579 = vmul.f32 %v1576, 1.442695
    %v1580 = vpow.pop %v1579
    %v1581 = vsel %vm151, %v1578, 0.0
    %1582 = vadd.xlane.f32.xlu0 %v1581
    %v1583 = vpop.xlane.xlu0 %1582
    %v1584 = vsel %vm151, %v1580, 0.0
    %1585 = vadd.xlane.f32.xlu0 %v1584
    %v1586 = vpop.xlane.xlu0 %1585
    %v1587 = vrcp.pop %v1583
    %v1588 = vmul.f32 %v1583, %v1587
    %v1589 = vsub.f32 1.0, %v1588
    %v1590 = vmul.f32 %v1587, %v1589
    %v1591 = vadd.f32 %v1587, %v1590
    %vm1592 = vweird.f32 %v1583
    %vm1593 = vweird.f32 %v1587
    %vm1594 = vmor %vm1592, %vm1593
    %v1595 = vsel %vm1594, %v1587, %v1591
    %v1596 = vand.u32 2147483647, %v1583
    %vm1597 = vcmp.eq.f32.partialorder %v1596, 8.507059e+37
    %v1598 = vand.u32 %v1583, 2147483648
    %v1599 = vor.u32 1.1754944e-38, %v1598
    %v1600 = vsel %vm1597, %v1599, %v1595
    %v1601 = vrcp.pop %v1586
    %v1602 = vmul.f32 %v1586, %v1601
    %v1603 = vsub.f32 1.0, %v1602
    %v1604 = vmul.f32 %v1601, %v1603
    %v1605 = vadd.f32 %v1601, %v1604
    %vm1606 = vweird.f32 %v1586
    %vm1607 = vweird.f32 %v1601
    %vm1608 = vmor %vm1606, %vm1607
    %v1609 = vsel %vm1608, %v1601, %v1605
    %v1610 = vand.u32 2147483647, %v1586
    %vm1611 = vcmp.eq.f32.partialorder %v1610, 8.507059e+37
    %v1612 = vand.u32 %v1586, 2147483648
    %v1613 = vor.u32 1.1754944e-38, %v1612
    %v1614 = vsel %vm1611, %v1613, %v1609
    %v1615 = vmul.f32 %v1578, %v1600
    %v1616 = vmul.f32 %v1580, %v1614
    %1617 = vrot.lane.b32.xlu0 %v1056, 40
    %v1618 = vpop.permute.xlu0 %1617
    %1619 = vrot.lane.b32.xlu0 %v1059, 40
    %v1620 = vpop.permute.xlu0 %1619
    %v1624 = vsel %vm151, %v1615, 0
    %v1627 = vsel %vm151, %v1616, 0
    %1629 = vmatpush.msra.mxu0 0.0
    %1630 = vmatpush.msra.mxu0 0.0
    %1631 = vmatpush.msra.mxu0 0.0
    %1632 = vmatpush.msra.mxu0 0.0
    %1633 = vmatpush.msra.mxu0 0.0
    %1634 = vmatpush.msra.mxu0 0.0
    %1635 = vmatpush.msra.mxu0 0.0
    %1636 = vmatpush.msra.mxu0 0.0
    %1637 = vmatpush.msra.mxu0 0.0
    %1638 = vmatpush.msra.mxu0 0.0
    %1639 = vmatpush.msra.mxu0 0.0
    %1640 = vmatpush.msra.mxu0 0.0
    %1641 = vmatpush.msra.mxu0 0.0
    %1642 = vmatpush.msra.mxu0 0.0
    %1643 = vmatpush.msra.mxu0 %v1620
    %1644 = vmatpush.msra.mxu0 %v1618
    %1645 = vmatmul.f32.gmra.mxu0 %v1624
    %v1646 = vpop.f32.mrf.mxu0
    %v1647 = vadd.f32 0.0, %v1646
    %1648 = vmatmul.f32.gmra.mxu0 %v1627
    %v1649 = vpop.f32.mrf.mxu0
    %v1650 = vadd.f32 0.0, %v1649
    %1651 = vdwg.mxu0
    %v1653 = vsel %vm115, %v1647, 0
    %v1656 = vsel %vm115, %v1650, 0
    %1658 = vmatpush.msra.mxu0 0.0
    %1659 = vmatpush.msra.mxu0 0.0
    %1660 = vmatpush.msra.mxu0 0.0
    %1661 = vmatpush.msra.mxu0 0.0
    %1662 = vmatpush.msra.mxu0 0.0
    %1663 = vmatpush.msra.mxu0 0.0
    %1664 = vmatpush.msra.mxu0 0.0
    %1665 = vmatpush.msra.mxu0 0.0
    %1666 = vmatpush.msra.mxu0 0.0
    %1667 = vmatpush.msra.mxu0 0.0
    %1668 = vmatpush.msra.mxu0 0.0
    %1669 = vmatpush.msra.mxu0 0.0
    %1670 = vmatpush.msra.mxu0 0.0
    %1671 = vmatpush.msra.mxu0 0.0
    %1672 = vmatpush.msra.mxu0 0.0
    %1673 = vmatpush.msra.mxu0 %v1010
    %1674 = vmatmul.f32.gmra.mxu0 %v1653
    %v1675 = vpop.f32.mrf.mxu0
    %v1676 = vadd.f32 0.0, %v1675
    %1677 = vmatmul.f32.gmra.mxu0 %v1656
    %v1678 = vpop.f32.mrf.mxu0
    %v1679 = vadd.f32 0.0, %v1678
    %1680 = vdwg.mxu0
    %v1681 = vadd.f32 %v1524, %v1676
    %v1682 = vadd.f32 %v1525, %v1679
    %v1683 = vperm.slane %v1028, 0
    %v1684 = vadd.f32 %v1681, %v1683
    %v1685 = vadd.f32 %v1682, %v1683
    %v1686 = vadd.f32 %v997, %v1684
    %v1687 = vadd.f32 %v998, %v1685
    %v1688 = vsel %vm79, %v1686, 0.0
    %1689 = vadd.xlane.f32.xlu0 %v1688
    %v1690 = vpop.xlane.xlu0 %1689
    %v1691 = vsel %vm79, %v1687, 0.0
    %1692 = vadd.xlane.f32.xlu0 %v1691
    %v1693 = vpop.xlane.xlu0 %1692
    %v1694 = vmul.f32 %v1690, %v750
    %v1695 = vmul.f32 %v1693, %v750
    %v1696 = vsub.f32 %v1686, %v1694
    %v1697 = vsub.f32 %v1687, %v1695
    %v1698 = vmul.f32 %v1696, %v1696
    %v1699 = vmul.f32 %v1697, %v1697
    %v1700 = vsel %vm79, %v1698, 0.0
    %1701 = vadd.xlane.f32.xlu0 %v1700
    %v1702 = vpop.xlane.xlu0 %1701
    %v1703 = vsel %vm79, %v1699, 0.0
    %1704 = vadd.xlane.f32.xlu0 %v1703
    %v1705 = vpop.xlane.xlu0 %1704
    %v1706 = vmul.f32 %v1702, %v769
    %v1707 = vmul.f32 %v1705, %v769
    %v1708 = vrsqrt.pop %v1706
    %v1709 = vmul.f32 %v1708, %v1706
    %v1710 = vmul.f32 %v1709, %v1708
    %v1711 = vmul.f32 0.5, %v1710
    %v1712 = vsub.f32 1.5, %v1711
    %v1713 = vmul.f32 %v1708, %v1712
    %v1714 = vmul.f32 %v1706, %v1713
    %vm1715 = vcmp.eq.f32.partialorder %v1706, inf
    %v1716 = vsel %vm1715, %v1706, %v1714
    %vm1717 = vcmp.eq.f32.partialorder %v1706, 0.0
    %v1718 = vand.u32 %v1706, 2147483648
    %v1719 = vsel %vm1717, %v1718, %v1716
    %v1720 = vrsqrt.pop %v1707
    %v1721 = vmul.f32 %v1720, %v1707
    %v1722 = vmul.f32 %v1721, %v1720
    %v1723 = vmul.f32 0.5, %v1722
    %v1724 = vsub.f32 1.5, %v1723
    %v1725 = vmul.f32 %v1720, %v1724
    %v1726 = vmul.f32 %v1707, %v1725
    %vm1727 = vcmp.eq.f32.partialorder %v1707, inf
    %v1728 = vsel %vm1727, %v1707, %v1726
    %vm1729 = vcmp.eq.f32.partialorder %v1707, 0.0
    %v1730 = vand.u32 %v1707, 2147483648
    %v1731 = vsel %vm1729, %v1730, %v1728
    %v1732 = vadd.f32 %v1719, 1e-06
    %v1733 = vadd.f32 %v1731, 1e-06
    %v1734 = vrcp.pop %v1732
    %v1735 = vmul.f32 %v1732, %v1734
    %v1736 = vsub.f32 1.0, %v1735
    %v1737 = vmul.f32 %v1734, %v1736
    %v1738 = vadd.f32 %v1734, %v1737
    %vm1739 = vweird.f32 %v1732
    %vm1740 = vweird.f32 %v1734
    %vm1741 = vmor %vm1739, %vm1740
    %v1742 = vsel %vm1741, %v1734, %v1738
    %v1743 = vand.u32 2147483647, %v1732
    %vm1744 = vcmp.eq.f32.partialorder %v1743, 8.507059e+37
    %v1745 = vand.u32 %v1732, 2147483648
    %v1746 = vor.u32 1.1754944e-38, %v1745
    %v1747 = vsel %vm1744, %v1746, %v1742
    %v1748 = vrcp.pop %v1733
    %v1749 = vmul.f32 %v1733, %v1748
    %v1750 = vsub.f32 1.0, %v1749
    %v1751 = vmul.f32 %v1748, %v1750
    %v1752 = vadd.f32 %v1748, %v1751
    %vm1753 = vweird.f32 %v1733
    %vm1754 = vweird.f32 %v1748
    %vm1755 = vmor %vm1753, %vm1754
    %v1756 = vsel %vm1755, %v1748, %v1752
    %v1757 = vand.u32 2147483647, %v1733
    %vm1758 = vcmp.eq.f32.partialorder %v1757, 8.507059e+37
    %v1759 = vand.u32 %v1733, 2147483648
    %v1760 = vor.u32 1.1754944e-38, %v1759
    %v1761 = vsel %vm1758, %v1760, %v1756
    %v1762 = vperm.slane %v1028, 1
    %v1763 = vmul.f32 %v1762, %v1696
    %v1764 = vmul.f32 %v1762, %v1697
    %v1765 = vmul.f32 %v1763, %v1747
    %v1766 = vmul.f32 %v1764, %v1761
    %v1767 = vperm.slane %v1028, 2
    %v1768 = vadd.f32 %v1765, %v1767
    %v1769 = vadd.f32 %v1766, %v1767
    %v1771 = vperm.slane %v1017, 0
    %v1774 = vsel %vm79, %v1768, 0
    %v1777 = vsel %vm79, %v1769, 0
    %1779 = vmatpush.msra.mxu0 0.0
    %1780 = vmatpush.msra.mxu0 0.0
    %1781 = vmatpush.msra.mxu0 0.0
    %1782 = vmatpush.msra.mxu0 0.0
    %1783 = vmatpush.msra.mxu0 0.0
    %1784 = vmatpush.msra.mxu0 0.0
    %1785 = vmatpush.msra.mxu0 0.0
    %1786 = vmatpush.msra.mxu0 0.0
    %1787 = vmatpush.msra.mxu0 0.0
    %1788 = vmatpush.msra.mxu0 0.0
    %1789 = vmatpush.msra.mxu0 0.0
    %1790 = vmatpush.msra.mxu0 0.0
    %1791 = vmatpush.msra.mxu0 %v1015
    %1792 = vmatpush.msra.mxu0 %v1014
    %1793 = vmatpush.msra.mxu0 %v1013
    %1794 = vmatpush.msra.mxu0 %v1012
    %1795 = vmatmul.f32.gmra.mxu0 %v1774
    %v1796 = vpop.f32.mrf.mxu0
    %v1797 = vadd.f32 %v1771, %v1796
    %1798 = vmatmul.f32.gmra.mxu0 %v1777
    %v1799 = vpop.f32.mrf.mxu0
    %v1800 = vadd.f32 %v1771, %v1799
    %1801 = vdwg.mxu0
    %v1802 = vmul.f32 %v1797, %v1797
    %v1803 = vmul.f32 %v1800, %v1800
    %v1804 = vmul.f32 %v1797, %v1802
    %v1805 = vmul.f32 %v1800, %v1803
    %v1806 = vmul.f32 %v1804, 0.044715
    %v1807 = vmul.f32 %v1805, 0.044715
    %v1808 = vadd.f32 %v1797, %v1806
    %v1809 = vadd.f32 %v1800, %v1807
    %v1810 = vmul.f32 %v1808, 0.7978846
    %v1811 = vmul.f32 %v1809, 0.7978846
    %v1812 = vtanh.pop %v1810
    %v1813 = vtanh.pop %v1811
    %v1814 = vadd.f32 %v1812, 1.0
    %v1815 = vadd.f32 %v1813, 1.0
    %v1816 = vmul.f32 %v1814, 0.5
    %v1817 = vmul.f32 %v1815, 0.5
    %v1818 = vmul.f32 %v1797, %v1816
    %v1819 = vmul.f32 %v1800, %v1817
    %v1820 = vperm.slane %v1028, 3
    %v1822 = vsel %vm885, %v1818, 0
    %v1825 = vsel %vm885, %v1819, 0
    %1827 = vmatpush.msra.mxu0 0.0
    %1828 = vmatpush.msra.mxu0 0.0
    %1829 = vmatpush.msra.mxu0 0.0
    %1830 = vmatpush.msra.mxu0 0.0
    %1831 = vmatpush.msra.mxu0 0.0
    %1832 = vmatpush.msra.mxu0 0.0
    %1833 = vmatpush.msra.mxu0 0.0
    %1834 = vmatpush.msra.mxu0 0.0
    %1835 = vmatpush.msra.mxu0 %v1026
    %1836 = vmatpush.msra.mxu0 %v1025
    %1837 = vmatpush.msra.mxu0 %v1024
    %1838 = vmatpush.msra.mxu0 %v1023
    %1839 = vmatpush.msra.mxu0 %v1022
    %1840 = vmatpush.msra.mxu0 %v1021
    %1841 = vmatpush.msra.mxu0 %v1020
    %1842 = vmatpush.msra.mxu0 %v1019
    %1843 = vmatmul.f32.gmra.mxu0 %v1822
    %v1844 = vpop.f32.mrf.mxu0
    %v1845 = vadd.f32 %v1820, %v1844
    %1846 = vmatmul.f32.gmra.mxu0 %v1825
    %v1847 = vpop.f32.mrf.mxu0
    %v1848 = vadd.f32 %v1820, %v1847
    %1849 = vdwg.mxu0
    %v1850 = vadd.f32 %v1768, %v1845
    %v1851 = vadd.f32 %v1769, %v1848
    %v1852 = vsel %vm79, %v1850, 0.0
    %1853 = vadd.xlane.f32.xlu0 %v1852
    %v1854 = vpop.xlane.xlu0 %1853
    %v1855 = vsel %vm79, %v1851, 0.0
    %1856 = vadd.xlane.f32.xlu0 %v1855
    %v1857 = vpop.xlane.xlu0 %1856
    %v1858 = vmul.f32 %v1854, %v750
    %v1859 = vmul.f32 %v1857, %v750
    %v1860 = vsub.f32 %v1850, %v1858
    %v1861 = vsub.f32 %v1851, %v1859
    %v1862 = vmul.f32 %v1860, %v1860
    %v1863 = vmul.f32 %v1861, %v1861
    %v1864 = vsel %vm79, %v1862, 0.0
    %1865 = vadd.xlane.f32.xlu0 %v1864
    %v1866 = vpop.xlane.xlu0 %1865
    %v1867 = vsel %vm79, %v1863, 0.0
    %1868 = vadd.xlane.f32.xlu0 %v1867
    %v1869 = vpop.xlane.xlu0 %1868
    %v1870 = vmul.f32 %v1866, %v769
    %v1871 = vmul.f32 %v1869, %v769
    %v1872 = vrsqrt.pop %v1870
    %v1873 = vmul.f32 %v1872, %v1870
    %v1874 = vmul.f32 %v1873, %v1872
    %v1875 = vmul.f32 0.5, %v1874
    %v1876 = vsub.f32 1.5, %v1875
    %v1877 = vmul.f32 %v1872, %v1876
    %v1878 = vmul.f32 %v1870, %v1877
    %vm1879 = vcmp.eq.f32.partialorder %v1870, inf
    %v1880 = vsel %vm1879, %v1870, %v1878
    %vm1881 = vcmp.eq.f32.partialorder %v1870, 0.0
    %v1882 = vand.u32 %v1870, 2147483648
    %v1883 = vsel %vm1881, %v1882, %v1880
    %v1884 = vrsqrt.pop %v1871
    %v1885 = vmul.f32 %v1884, %v1871
    %v1886 = vmul.f32 %v1885, %v1884
    %v1887 = vmul.f32 0.5, %v1886
    %v1888 = vsub.f32 1.5, %v1887
    %v1889 = vmul.f32 %v1884, %v1888
    %v1890 = vmul.f32 %v1871, %v1889
    %vm1891 = vcmp.eq.f32.partialorder %v1871, inf
    %v1892 = vsel %vm1891, %v1871, %v1890
    %vm1893 = vcmp.eq.f32.partialorder %v1871, 0.0
    %v1894 = vand.u32 %v1871, 2147483648
    %v1895 = vsel %vm1893, %v1894, %v1892
    %v1896 = vadd.f32 %v1883, 1e-06
    %v1897 = vadd.f32 %v1895, 1e-06
    %v1898 = vrcp.pop %v1896
    %v1899 = vmul.f32 %v1896, %v1898
    %v1900 = vsub.f32 1.0, %v1899
    %v1901 = vmul.f32 %v1898, %v1900
    %v1902 = vadd.f32 %v1898, %v1901
    %vm1903 = vweird.f32 %v1896
    %vm1904 = vweird.f32 %v1898
    %vm1905 = vmor %vm1903, %vm1904
    %v1906 = vsel %vm1905, %v1898, %v1902
    %v1907 = vand.u32 2147483647, %v1896
    %vm1908 = vcmp.eq.f32.partialorder %v1907, 8.507059e+37
    %v1909 = vand.u32 %v1896, 2147483648
    %v1910 = vor.u32 1.1754944e-38, %v1909
    %v1911 = vsel %vm1908, %v1910, %v1906
    %v1912 = vrcp.pop %v1897
    %v1913 = vmul.f32 %v1897, %v1912
    %v1914 = vsub.f32 1.0, %v1913
    %v1915 = vmul.f32 %v1912, %v1914
    %v1916 = vadd.f32 %v1912, %v1915
    %vm1917 = vweird.f32 %v1897
    %vm1918 = vweird.f32 %v1912
    %vm1919 = vmor %vm1917, %vm1918
    %v1920 = vsel %vm1919, %v1912, %v1916
    %v1921 = vand.u32 2147483647, %v1897
    %vm1922 = vcmp.eq.f32.partialorder %v1921, 8.507059e+37
    %v1923 = vand.u32 %v1897, 2147483648
    %v1924 = vor.u32 1.1754944e-38, %v1923
    %v1925 = vsel %vm1922, %v1924, %v1920
    %v1926 = vperm.slane %v1028, 4
    %v1927 = vmul.f32 %v1926, %v1860
    %v1928 = vmul.f32 %v1926, %v1861
    %v1929 = vmul.f32 %v1927, %v1911
    %v1930 = vmul.f32 %v1928, %v1925
    %v1931 = vperm.slane %v1028, 5
    %v1932 = vadd.f32 %v1929, %v1931
    %v1933 = vadd.f32 %v1930, %v1931
    %1934 = vst.msk [vmem:[#allocation5] sm:$0xff] %vm79, %v1932
    %1935 = vst.msk [vmem:[#allocation5 + $0x8] sm:$0xff] %vm79, %v1933
    // Predicated region
    $region42: #{tpu_custom_call.1} parent=1 // pred_check
      _
    $region43: #{tpu_custom_call.1} parent=1 // pred_check_branch
      %1937 = sbr.rel (0) target = $region45
    $region44: #{tpu_custom_call.1} parent=1 // pred_region
      %1939 = vsyncadd [#allocation4], 0
      %s1940 = sshll.u32 [#allocation5], 4
      %s1941 = int_to_ptr.vmem [resolvable:$true] %s1940
      %s1942 = sshll.u32 %s9, 4
      %s1943 = int_to_ptr.hbm [resolvable:$true] %s1942
      %1948 = dma.vmem_to_hbm [thread:$0]  %s1941, 256, %s1943, [#allocation4], 128, 128, 8
    $region45: #{tpu_custom_call.1} parent=1 // pred_fallthru
      _
    // Predicated region
    $region46: #{tpu_custom_call.1} parent=1 // pred_check
      _
    $region47: #{tpu_custom_call.1} parent=1 // pred_check_branch
      %1950 = sbr.rel (0) target = $region49
    $region48: #{tpu_custom_call.1} parent=1 // pred_region
      %1952 = dma.done [#allocation4], 256
    $region49: #{tpu_custom_call.1} parent=1 // pred_fallthru
      _
    %1953 = vsyncpa [#allocation3], 1
    %1954 = vsyncpa [#allocation4], 1

</llo_original>
